<compile_context>
chip_gen: v5e
topology: v5e:2x2
jax: 0.10.0
libtpu: 0.0.40
codegen_flags: <defaults>
</compile_context>

<pallas_src>
import functools

import jax
import jax.numpy as jnp
from jax.experimental import pallas as pl
from jax.experimental.pallas import tpu as pltpu


def routing_capsule_kernel(x_ref, w_ref, seg_ref, o_ref, *, n_primary, n_caps,
                           cap_len, iterations):
    # x_ref  : (1, P, N)   primary capsules for this batch element
    # w_ref  : (N, P, K)   routing weights (same block for every grid step)
    # seg_ref: (K, K)      block-diagonal 0/1 "same capsule" matrix
    # o_ref  : (1, 1, K)   output capsules, lane-dense
    x = x_ref[0].astype(jnp.float32)                       # (P, N)
    seg_mat = seg_ref[...]                                 # (K, K)

    # --- squash primary capsules along N (per row) ------------------------
    ss = jnp.sum(x * x, axis=1, keepdims=True)             # (P, 1)
    x = x * (ss * jax.lax.rsqrt(ss) / (1.0 + ss))          # sqrt(ss)/(1+ss)

    # --- u[p, k] = sum_n x[p, n] * w[n, p, k]  (N tiny -> unrolled VPU FMA)
    u = x[:, 0:1] * w_ref[0]
    for n in range(1, n_primary):
        u = u + x[:, n:n + 1] * w_ref[n]                   # (P, K)

    def seg_allsum(t):
        # per-capsule (cap_len-lane segment) sum, broadcast back over segment
        return jnp.dot(t, seg_mat, preferred_element_type=jnp.float32)

    def squash_row(s):                                     # s: (1, K)
        sq = seg_allsum(s * s)                             # ||s_nc||^2 per lane
        return s * (sq * jax.lax.rsqrt(sq) / (1.0 + sq))

    # --- iteration 0: bias == 0 -> routing coefficients are uniform 1/NC --
    s = jnp.sum(u, axis=0, keepdims=True) * (1.0 / n_caps)  # (1, K)
    v = squash_row(s)

    # --- remaining routing iterations --------------------------------------
    bias = jnp.zeros_like(u)                               # expanded (P, K) bias
    for _ in range(1, iterations):
        bias = bias + seg_allsum(u * v)                    # (P, K)
        # softmax over the capsule axis on the expanded layout: every value is
        # repeated cap_len times, so sum over K == cap_len * sum over NC.
        m = jnp.max(bias, axis=1, keepdims=True)           # (P, 1)
        e = jnp.exp(bias - m)                              # (P, K)
        den = jnp.sum(e, axis=1, keepdims=True)            # (P, 1)
        c = e * (cap_len * pl.reciprocal(den, approx=False))  # (P, K) coeffs
        s = jnp.sum(c * u, axis=0, keepdims=True)          # (1, K)
        v = squash_row(s)

    o_ref[0] = v


def routing_capsule(x, weight, *, n_capsules, capsule_length, iterations=3):
    """x: (B, pcl, h, w, npc); weight: (pcl*h*w, npc, n_capsules*capsule_length)."""
    B, pcl, h, w_, npc = x.shape
    P = pcl * h * w_
    K = n_capsules * capsule_length

    x3 = x.reshape(B, P, npc).astype(jnp.float32)                  # (B, P, N)
    w_t = jnp.transpose(weight.astype(jnp.float32), (1, 0, 2))     # (N, P, K)
    seg_ids = jnp.arange(K, dtype=jnp.int32) // capsule_length
    seg_mat = (seg_ids[:, None] == seg_ids[None, :]).astype(jnp.float32)  # (K, K)

    kern = functools.partial(
        routing_capsule_kernel,
        n_primary=npc, n_caps=n_capsules, cap_len=capsule_length,
        iterations=iterations)

    out = pl.pallas_call(
        kern,
        out_shape=jax.ShapeDtypeStruct((B, 1, K), jnp.float32),
        grid_spec=pltpu.PrefetchScalarGridSpec(
            num_scalar_prefetch=0,
            grid=(B,),
            in_specs=[
                pl.BlockSpec((1, P, npc), lambda b: (b, 0, 0)),
                pl.BlockSpec((npc, P, K), lambda b: (0, 0, 0)),
                pl.BlockSpec((K, K), lambda b: (0, 0)),
            ],
            out_specs=pl.BlockSpec((1, 1, K), lambda b: (b, 0, 0)),
        ),
        compiler_params=pltpu.CompilerParams(
            dimension_semantics=("parallel",)),
    )(x3, w_t, seg_mat)
    return out.reshape(B, n_capsules, capsule_length)


def routing_capsule_ref(x, weight, *, n_capsules, capsule_length, iterations=3):
    """Pure-JAX reference matching the PyTorch forward exactly."""
    B, pcl, h, w_, npc = x.shape
    P = pcl * h * w_
    t = x.reshape(B, P, npc).astype(jnp.float32)
    ss = jnp.sum(t ** 2, axis=2, keepdims=True)
    t = ss / (1 + ss) * t / jnp.sqrt(ss)
    u = jnp.einsum('bpn,pnk->bpk', t, weight.astype(jnp.float32),
                   precision=jax.lax.Precision.HIGHEST)
    u = u.reshape(B, P, n_capsules, capsule_length)
    bias = jnp.zeros((B, P, n_capsules), jnp.float32)
    v = None
    for i in range(iterations):
        c = jax.nn.softmax(bias, axis=2)
        s = jnp.sum(c[..., None] * u, axis=1)
        ss = jnp.sum(s ** 2, axis=2, keepdims=True)
        v = ss / (1 + ss) * s / jnp.sqrt(ss)
        if i < iterations - 1:
            bias = bias + jnp.sum(u * v[:, None, :, :], axis=3)
    return v


if __name__ == "__main__":
    # Small shapes consistent with the module's forward:
    #   tensor_size = (B, pcl, h, w, npc)
    B, pcl, h, w_, npc = 2, 4, 4, 4, 8
    n_capsules, capsule_length, iterations = 10, 16, 3
    P = pcl * h * w_
    K = n_capsules * capsule_length

    key = jax.random.PRNGKey(0)
    kx, kw = jax.random.split(key)
    x = jax.random.normal(kx, (B, pcl, h, w_, npc), dtype=jnp.float32)

    # Deterministic xavier_normal_(gain=0.01) equivalent for shape (P, npc, K).
    fan_in, fan_out = npc * K, P * K
    std = 0.01 * (2.0 / (fan_in + fan_out)) ** 0.5
    weight = std * jax.random.normal(kw, (P, npc, K), dtype=jnp.float32)

    v = routing_capsule(x, weight, n_capsules=n_capsules,
                        capsule_length=capsule_length, iterations=iterations)
    v = jax.block_until_ready(v)

    v_ref = routing_capsule_ref(x, weight, n_capsules=n_capsules,
                                capsule_length=capsule_length,
                                iterations=iterations)
    assert v.shape == (B, n_capsules, capsule_length)
    # Scale-aware check (values are ~1e-8 with the gain=0.01 init, so a plain
    # atol=1e-5 allclose would be vacuous).
    max_err = float(jnp.max(jnp.abs(v - v_ref)))
    ref_mag = float(jnp.max(jnp.abs(v_ref)))
    assert max_err <= 1e-2 * ref_mag + 1e-12, (max_err, ref_mag)
    print("KERNEL_OK")
</pallas_src>

<mosaic_0001>
module attributes {stable_mosaic.version = 11 : i64} {
  func.func @routing_capsule_kernel(%arg0: i32, %arg1: memref<1x64x8xf32, #tpu.memory_space<vmem>>, %arg2: memref<8x64x160xf32, #tpu.memory_space<vmem>>, %arg3: memref<160x160xf32, #tpu.memory_space<vmem>>, %arg4: memref<1x1x160xf32, #tpu.memory_space<vmem>>) attributes {dimension_semantics = [#tpu.dimension_semantics<parallel>], iteration_bounds = array<i64: 2>, scalar_prefetch = 0 : i64, scratch_operands = 0 : i64, tpu.core_type = #tpu.core_type<tc>, window_params = [{transform_indices = @transform_0, window_bounds = array<i64: 1, 64, 8>}, {pipeline_mode = #tpu.pipeline_mode<synchronous>, transform_indices = @transform_1, window_bounds = array<i64: 8, 64, 160>}, {pipeline_mode = #tpu.pipeline_mode<synchronous>, transform_indices = @transform_2, window_bounds = array<i64: 160, 160>}, {transform_indices = @transform_3, window_bounds = array<i64: 1, 1, 160>}]} {
    %c0 = arith.constant 0 : index
    %c0_0 = arith.constant 0 : index
    %c0_1 = arith.constant 0 : index
    %0 = vector.load %arg1[%c0, %c0_0, %c0_1] : memref<1x64x8xf32, #tpu.memory_space<vmem>>, vector<1x64x8xf32>
    %1 = vector.shape_cast %0 : vector<1x64x8xf32> to vector<64x8xf32>
    %c0_2 = arith.constant 0 : index
    %c0_3 = arith.constant 0 : index
    %2 = vector.load %arg3[%c0_2, %c0_3] : memref<160x160xf32, #tpu.memory_space<vmem>>, vector<160x160xf32>
    %3 = arith.mulf %1, %1 : vector<64x8xf32>
    %cst = arith.constant dense<0.000000e+00> : vector<64xf32>
    %4 = vector.multi_reduction <add>, %3, %cst [1] : vector<64x8xf32> to vector<64xf32>
    %5 = vector.shape_cast %4 : vector<64xf32> to vector<64x1xf32>
    %6 = math.rsqrt %5 : vector<64x1xf32>
    %7 = arith.mulf %5, %6 : vector<64x1xf32>
    %cst_4 = arith.constant 1.000000e+00 : f32
    %8 = vector.broadcast %cst_4 : f32 to vector<64x1xf32>
    %9 = arith.addf %8, %5 : vector<64x1xf32>
    %10 = arith.divf %7, %9 : vector<64x1xf32>
    %11 = vector.broadcast %10 : vector<64x1xf32> to vector<64x8xf32>
    %12 = arith.mulf %1, %11 : vector<64x8xf32>
    %13 = vector.extract_strided_slice %12 {offsets = [0, 0], sizes = [64, 1], strides = [1, 1]} : vector<64x8xf32> to vector<64x1xf32>
    %c0_5 = arith.constant 0 : index
    %c0_6 = arith.constant 0 : index
    %c0_7 = arith.constant 0 : index
    %14 = vector.load %arg2[%c0_5, %c0_6, %c0_7] : memref<8x64x160xf32, #tpu.memory_space<vmem>>, vector<1x64x160xf32>
    %15 = vector.shape_cast %14 : vector<1x64x160xf32> to vector<64x160xf32>
    %16 = vector.broadcast %13 : vector<64x1xf32> to vector<64x160xf32>
    %17 = arith.mulf %16, %15 : vector<64x160xf32>
    %18 = vector.extract_strided_slice %12 {offsets = [0, 1], sizes = [64, 1], strides = [1, 1]} : vector<64x8xf32> to vector<64x1xf32>
    %c1 = arith.constant 1 : index
    %c0_8 = arith.constant 0 : index
    %c0_9 = arith.constant 0 : index
    %19 = vector.load %arg2[%c1, %c0_8, %c0_9] : memref<8x64x160xf32, #tpu.memory_space<vmem>>, vector<1x64x160xf32>
    %20 = vector.shape_cast %19 : vector<1x64x160xf32> to vector<64x160xf32>
    %21 = vector.broadcast %18 : vector<64x1xf32> to vector<64x160xf32>
    %22 = arith.mulf %21, %20 : vector<64x160xf32>
    %23 = arith.addf %17, %22 : vector<64x160xf32>
    %24 = vector.extract_strided_slice %12 {offsets = [0, 2], sizes = [64, 1], strides = [1, 1]} : vector<64x8xf32> to vector<64x1xf32>
    %c2 = arith.constant 2 : index
    %c0_10 = arith.constant 0 : index
    %c0_11 = arith.constant 0 : index
    %25 = vector.load %arg2[%c2, %c0_10, %c0_11] : memref<8x64x160xf32, #tpu.memory_space<vmem>>, vector<1x64x160xf32>
    %26 = vector.shape_cast %25 : vector<1x64x160xf32> to vector<64x160xf32>
    %27 = vector.broadcast %24 : vector<64x1xf32> to vector<64x160xf32>
    %28 = arith.mulf %27, %26 : vector<64x160xf32>
    %29 = arith.addf %23, %28 : vector<64x160xf32>
    %30 = vector.extract_strided_slice %12 {offsets = [0, 3], sizes = [64, 1], strides = [1, 1]} : vector<64x8xf32> to vector<64x1xf32>
    %c3 = arith.constant 3 : index
    %c0_12 = arith.constant 0 : index
    %c0_13 = arith.constant 0 : index
    %31 = vector.load %arg2[%c3, %c0_12, %c0_13] : memref<8x64x160xf32, #tpu.memory_space<vmem>>, vector<1x64x160xf32>
    %32 = vector.shape_cast %31 : vector<1x64x160xf32> to vector<64x160xf32>
    %33 = vector.broadcast %30 : vector<64x1xf32> to vector<64x160xf32>
    %34 = arith.mulf %33, %32 : vector<64x160xf32>
    %35 = arith.addf %29, %34 : vector<64x160xf32>
    %36 = vector.extract_strided_slice %12 {offsets = [0, 4], sizes = [64, 1], strides = [1, 1]} : vector<64x8xf32> to vector<64x1xf32>
    %c4 = arith.constant 4 : index
    %c0_14 = arith.constant 0 : index
    %c0_15 = arith.constant 0 : index
    %37 = vector.load %arg2[%c4, %c0_14, %c0_15] : memref<8x64x160xf32, #tpu.memory_space<vmem>>, vector<1x64x160xf32>
    %38 = vector.shape_cast %37 : vector<1x64x160xf32> to vector<64x160xf32>
    %39 = vector.broadcast %36 : vector<64x1xf32> to vector<64x160xf32>
    %40 = arith.mulf %39, %38 : vector<64x160xf32>
    %41 = arith.addf %35, %40 : vector<64x160xf32>
    %42 = vector.extract_strided_slice %12 {offsets = [0, 5], sizes = [64, 1], strides = [1, 1]} : vector<64x8xf32> to vector<64x1xf32>
    %c5 = arith.constant 5 : index
    %c0_16 = arith.constant 0 : index
    %c0_17 = arith.constant 0 : index
    %43 = vector.load %arg2[%c5, %c0_16, %c0_17] : memref<8x64x160xf32, #tpu.memory_space<vmem>>, vector<1x64x160xf32>
    %44 = vector.shape_cast %43 : vector<1x64x160xf32> to vector<64x160xf32>
    %45 = vector.broadcast %42 : vector<64x1xf32> to vector<64x160xf32>
    %46 = arith.mulf %45, %44 : vector<64x160xf32>
    %47 = arith.addf %41, %46 : vector<64x160xf32>
    %48 = vector.extract_strided_slice %12 {offsets = [0, 6], sizes = [64, 1], strides = [1, 1]} : vector<64x8xf32> to vector<64x1xf32>
    %c6 = arith.constant 6 : index
    %c0_18 = arith.constant 0 : index
    %c0_19 = arith.constant 0 : index
    %49 = vector.load %arg2[%c6, %c0_18, %c0_19] : memref<8x64x160xf32, #tpu.memory_space<vmem>>, vector<1x64x160xf32>
    %50 = vector.shape_cast %49 : vector<1x64x160xf32> to vector<64x160xf32>
    %51 = vector.broadcast %48 : vector<64x1xf32> to vector<64x160xf32>
    %52 = arith.mulf %51, %50 : vector<64x160xf32>
    %53 = arith.addf %47, %52 : vector<64x160xf32>
    %54 = vector.extract_strided_slice %12 {offsets = [0, 7], sizes = [64, 1], strides = [1, 1]} : vector<64x8xf32> to vector<64x1xf32>
    %c7 = arith.constant 7 : index
    %c0_20 = arith.constant 0 : index
    %c0_21 = arith.constant 0 : index
    %55 = vector.load %arg2[%c7, %c0_20, %c0_21] : memref<8x64x160xf32, #tpu.memory_space<vmem>>, vector<1x64x160xf32>
    %56 = vector.shape_cast %55 : vector<1x64x160xf32> to vector<64x160xf32>
    %57 = vector.broadcast %54 : vector<64x1xf32> to vector<64x160xf32>
    %58 = arith.mulf %57, %56 : vector<64x160xf32>
    %59 = arith.addf %53, %58 : vector<64x160xf32>
    %cst_22 = arith.constant dense<0.000000e+00> : vector<160xf32>
    %60 = vector.multi_reduction <add>, %59, %cst_22 [0] : vector<64x160xf32> to vector<160xf32>
    %61 = vector.shape_cast %60 : vector<160xf32> to vector<1x160xf32>
    %cst_23 = arith.constant 1.000000e-01 : f32
    %62 = vector.broadcast %cst_23 : f32 to vector<1x160xf32>
    %63 = arith.mulf %61, %62 : vector<1x160xf32>
    %64 = arith.mulf %63, %63 : vector<1x160xf32>
    %cst_24 = arith.constant dense<0.000000e+00> : vector<1x160xf32>
    %65 = tpu.matmul %64, %2, %cst_24 {dimension_numbers = #tpu.dot_dimension_numbers<[1], [0], [0], [1], [0, 0, 1, 1], [], []>} : vector<1x160xf32>, vector<160x160xf32>, vector<1x160xf32> -> vector<1x160xf32>
    %66 = math.rsqrt %65 : vector<1x160xf32>
    %67 = arith.mulf %65, %66 : vector<1x160xf32>
    %cst_25 = arith.constant 1.000000e+00 : f32
    %68 = vector.broadcast %cst_25 : f32 to vector<1x160xf32>
    %69 = arith.addf %68, %65 : vector<1x160xf32>
    %70 = arith.divf %67, %69 : vector<1x160xf32>
    %71 = arith.mulf %63, %70 : vector<1x160xf32>
    %cst_26 = arith.constant 0.000000e+00 : f32
    %72 = vector.broadcast %cst_26 : f32 to vector<64x160xf32>
    %73 = vector.broadcast %71 : vector<1x160xf32> to vector<64x160xf32>
    %74 = arith.mulf %59, %73 : vector<64x160xf32>
    %cst_27 = arith.constant dense<0.000000e+00> : vector<64x160xf32>
    %75 = tpu.matmul %74, %2, %cst_27 {dimension_numbers = #tpu.dot_dimension_numbers<[1], [0], [0], [1], [0, 0, 1, 1], [], []>} : vector<64x160xf32>, vector<160x160xf32>, vector<64x160xf32> -> vector<64x160xf32>
    %76 = arith.addf %72, %75 : vector<64x160xf32>
    %cst_28 = arith.constant dense<0xFF800000> : vector<64xf32>
    %77 = vector.multi_reduction <maximumf>, %76, %cst_28 [1] : vector<64x160xf32> to vector<64xf32>
    %78 = vector.shape_cast %77 : vector<64xf32> to vector<64x1xf32>
    %79 = vector.broadcast %78 : vector<64x1xf32> to vector<64x160xf32>
    %80 = arith.subf %76, %79 : vector<64x160xf32>
    %81 = math.exp %80 : vector<64x160xf32>
    %cst_29 = arith.constant dense<0.000000e+00> : vector<64xf32>
    %82 = vector.multi_reduction <add>, %81, %cst_29 [1] : vector<64x160xf32> to vector<64xf32>
    %83 = vector.shape_cast %82 : vector<64xf32> to vector<64x1xf32>
    %84 = tpu.reciprocal %83 : vector<64x1xf32> -> vector<64x1xf32>
    %cst_30 = arith.constant 1.600000e+01 : f32
    %85 = vector.broadcast %cst_30 : f32 to vector<64x1xf32>
    %86 = arith.mulf %85, %84 : vector<64x1xf32>
    %87 = vector.broadcast %86 : vector<64x1xf32> to vector<64x160xf32>
    %88 = arith.mulf %81, %87 : vector<64x160xf32>
    %89 = arith.mulf %88, %59 : vector<64x160xf32>
    %cst_31 = arith.constant dense<0.000000e+00> : vector<160xf32>
    %90 = vector.multi_reduction <add>, %89, %cst_31 [0] : vector<64x160xf32> to vector<160xf32>
    %91 = vector.shape_cast %90 : vector<160xf32> to vector<1x160xf32>
    %92 = arith.mulf %91, %91 : vector<1x160xf32>
    %cst_32 = arith.constant dense<0.000000e+00> : vector<1x160xf32>
    %93 = tpu.matmul %92, %2, %cst_32 {dimension_numbers = #tpu.dot_dimension_numbers<[1], [0], [0], [1], [0, 0, 1, 1], [], []>} : vector<1x160xf32>, vector<160x160xf32>, vector<1x160xf32> -> vector<1x160xf32>
    %94 = math.rsqrt %93 : vector<1x160xf32>
    %95 = arith.mulf %93, %94 : vector<1x160xf32>
    %cst_33 = arith.constant 1.000000e+00 : f32
    %96 = vector.broadcast %cst_33 : f32 to vector<1x160xf32>
    %97 = arith.addf %96, %93 : vector<1x160xf32>
    %98 = arith.divf %95, %97 : vector<1x160xf32>
    %99 = arith.mulf %91, %98 : vector<1x160xf32>
    %100 = vector.broadcast %99 : vector<1x160xf32> to vector<64x160xf32>
    %101 = arith.mulf %59, %100 : vector<64x160xf32>
    %cst_34 = arith.constant dense<0.000000e+00> : vector<64x160xf32>
    %102 = tpu.matmul %101, %2, %cst_34 {dimension_numbers = #tpu.dot_dimension_numbers<[1], [0], [0], [1], [0, 0, 1, 1], [], []>} : vector<64x160xf32>, vector<160x160xf32>, vector<64x160xf32> -> vector<64x160xf32>
    %103 = arith.addf %76, %102 : vector<64x160xf32>
    %cst_35 = arith.constant dense<0xFF800000> : vector<64xf32>
    %104 = vector.multi_reduction <maximumf>, %103, %cst_35 [1] : vector<64x160xf32> to vector<64xf32>
    %105 = vector.shape_cast %104 : vector<64xf32> to vector<64x1xf32>
    %106 = vector.broadcast %105 : vector<64x1xf32> to vector<64x160xf32>
    %107 = arith.subf %103, %106 : vector<64x160xf32>
    %108 = math.exp %107 : vector<64x160xf32>
    %cst_36 = arith.constant dense<0.000000e+00> : vector<64xf32>
    %109 = vector.multi_reduction <add>, %108, %cst_36 [1] : vector<64x160xf32> to vector<64xf32>
    %110 = vector.shape_cast %109 : vector<64xf32> to vector<64x1xf32>
    %111 = tpu.reciprocal %110 : vector<64x1xf32> -> vector<64x1xf32>
    %cst_37 = arith.constant 1.600000e+01 : f32
    %112 = vector.broadcast %cst_37 : f32 to vector<64x1xf32>
    %113 = arith.mulf %112, %111 : vector<64x1xf32>
    %114 = vector.broadcast %113 : vector<64x1xf32> to vector<64x160xf32>
    %115 = arith.mulf %108, %114 : vector<64x160xf32>
    %116 = arith.mulf %115, %59 : vector<64x160xf32>
    %cst_38 = arith.constant dense<0.000000e+00> : vector<160xf32>
    %117 = vector.multi_reduction <add>, %116, %cst_38 [0] : vector<64x160xf32> to vector<160xf32>
    %118 = vector.shape_cast %117 : vector<160xf32> to vector<1x160xf32>
    %119 = arith.mulf %118, %118 : vector<1x160xf32>
    %cst_39 = arith.constant dense<0.000000e+00> : vector<1x160xf32>
    %120 = tpu.matmul %119, %2, %cst_39 {dimension_numbers = #tpu.dot_dimension_numbers<[1], [0], [0], [1], [0, 0, 1, 1], [], []>} : vector<1x160xf32>, vector<160x160xf32>, vector<1x160xf32> -> vector<1x160xf32>
    %121 = math.rsqrt %120 : vector<1x160xf32>
    %122 = arith.mulf %120, %121 : vector<1x160xf32>
    %cst_40 = arith.constant 1.000000e+00 : f32
    %123 = vector.broadcast %cst_40 : f32 to vector<1x160xf32>
    %124 = arith.addf %123, %120 : vector<1x160xf32>
    %125 = arith.divf %122, %124 : vector<1x160xf32>
    %126 = arith.mulf %118, %125 : vector<1x160xf32>
    %c0_41 = arith.constant 0 : index
    %c0_42 = arith.constant 0 : index
    %c0_43 = arith.constant 0 : index
    %127 = vector.load %arg4[%c0_41, %c0_42, %c0_43] : memref<1x1x160xf32, #tpu.memory_space<vmem>>, vector<1x1x160xf32>
    %128 = vector.shape_cast %127 : vector<1x1x160xf32> to vector<1x160xf32>
    %129 = vector.shape_cast %126 : vector<1x160xf32> to vector<1x1x160xf32>
    tpu.vector_store %arg4[%c0_41, %c0_42, %c0_43], %129 {strides = array<i32>} : memref<1x1x160xf32, #tpu.memory_space<vmem>>, vector<1x1x160xf32>,
    return
  }
  func.func @transform_0(%arg0: i32) -> (i32, i32, i32) {
    %c0_i32 = arith.constant 0 : i32
    %c0_i32_0 = arith.constant 0 : i32
    %c0_i32_1 = arith.constant 0 : i32
    return %arg0, %c0_i32, %c0_i32_0 : i32, i32, i32
  }
  func.func @transform_1(%arg0: i32) -> (i32, i32, i32) {
    %c0_i32 = arith.constant 0 : i32
    %c0_i32_0 = arith.constant 0 : i32
    %c0_i32_1 = arith.constant 0 : i32
    %c0_i32_2 = arith.constant 0 : i32
    return %c0_i32, %c0_i32_0, %c0_i32_1 : i32, i32, i32
  }
  func.func @transform_2(%arg0: i32) -> (i32, i32) {
    %c0_i32 = arith.constant 0 : i32
    %c0_i32_0 = arith.constant 0 : i32
    %c0_i32_1 = arith.constant 0 : i32
    return %c0_i32, %c0_i32_0 : i32, i32
  }
  func.func @transform_3(%arg0: i32) -> (i32, i32, i32) {
    %c0_i32 = arith.constant 0 : i32
    %c0_i32_0 = arith.constant 0 : i32
    %c0_i32_1 = arith.constant 0 : i32
    return %arg0, %c0_i32, %c0_i32_0 : i32, i32, i32
  }
}

</mosaic_0001>

<llo_original>
// kernel: tpu_custom_call.1
$region0: #{tpu_custom_call.1}
  #allocation0 [shape = 'u32[]', space=smem, size = 0x4, offset = 0x4, fixed_abs, tag = 'smem constant byte address 0x4 - core index']
  #allocation1 [shape = 'u32[72,128]{1,0:T(1,128)}', space=vmem, size = 0x9000, scoped, tag = 'internal scratch']
  %s0 = inlined_call_operand.vmem [shape: f32[2,64,8], index: 0, kind: input, shape index: {}]
  %s1 = inlined_call_operand.hbm [shape: f32[8,64,160], index: 1, kind: input, shape index: {}]
  %s2 = inlined_call_operand.hbm [shape: f32[160,160], index: 2, kind: input, shape index: {}]
  %s3 = inlined_call_operand.hbm [shape: f32[2,1,160], index: 3, kind: output, shape index: {}]
  %s4 = sld [smem:[#allocation0]]
  $region53: #{tpu_custom_call.1} parent=0
    _
  %s6 = ssub.s32 1, %s4
  %s7 = scalar_select 0, %s6, %s4
  $region1: #{tpu_custom_call.1} parent=0
    #allocation2 [shape = 'u8[524288]{0}', space=vmem, size = 0x80000, scoped, tag = 'input window, operand 1, single buffered']
    #allocation3 [shape = 's32[2]{0}', space=sflag, size = 0x8, scoped, tag = 'scoped memory for tpu_custom_call.1']
    #allocation4 [shape = 's32[2]{0}', space=sflag, size = 0x8, scoped, tag = 'scoped memory for tpu_custom_call.1']
    #allocation5 [shape = 'u8[163840]{0}', space=vmem, size = 0x28000, scoped, tag = 'input window, operand 2, single buffered']
    #allocation6 [shape = 's32[1]{0}', space=sflag, size = 0x4, scoped, tag = 'scoped memory for tpu_custom_call.1']
    #allocation7 [shape = 'u8[2048]{0}', space=vmem, size = 0x800, scoped, tag = 'output window, operand 0']
    %8 = vsyncpa [#allocation3], 0
    %9 = vsyncpa [#allocation6], 0
    %10 = vsyncpa [#allocation4], 0
    %s11 = scalar_lea.sflag [#allocation4], 1
    %12 = vsyncpa %s11, 0
    loop: start=0, step=1, limit=4
    $region2: #{tpu_custom_call.1} parent=1 // loop_pre_header
      _
    $region3: #{tpu_custom_call.1} parent=1 // loop_header
      %s14 = sphi 0, %s18
      %p15 = scmp.ge.s32.totalorder %s14, 4
      %s24 = sphi 0, %s26
      %s27 = sphi 0, %s24
      %s28 = sphi 0, %s27
      %s44 = sphi 0, %s28
      %s48 = sphi 0, %s48
      %s50 = sphi 0, %s48
      %s51 = sphi 0, %s50
      %s65 = sphi 0, %s51
      %s69 = sphi 0, %s69
      %s71 = sphi 0, %s69
      %s72 = sphi 0, %s71
      %s86 = sphi 0, %s72
      %s92 = sphi 0, %s94
      %s95 = sphi 0, %s92
      %s96 = sphi 0, %s95
      %s112 = sphi 0, %s96
    $region4: #{tpu_custom_call.1} parent=1 // loop_header_branch
      %17 = sbr.rel (%p15) target = $region8
    $region5: #{tpu_custom_call.1} parent=1 // loop_body
      %s19 = ssub.s32 %s14, 1
      %s20 = ssub.s32 %s14, 2
      %s21 = sadd.s32 %s14, 1
      %s22 = ssub.s32 %s14, %s21
      %p23 = scmp.eq.s32.totalorder %s22, 0
      %s25 = sadd.s32 %s24, 1
      %s26 = scalar_select %p23, %s24, %s25
      %p29 = pneg %p23
      %p30 = scmp.eq.s32.totalorder %s14, 1
      %p31 = por %p29, %p30
      %p32 = scmp.ne.s32.totalorder %s24, %s27
      %p33 = scmp.eq.s32.totalorder %s14, 0
      %p34 = por %p32, %p33
      %p35 = scmp.ne.s32.totalorder %s24, %s27
      %p36 = scmp.eq.s32.totalorder %s19, 1
      %p37 = por %p35, %p36
      %p38 = scmp.ne.s32.totalorder %s27, %s28
      %p39 = scmp.eq.s32.totalorder %s19, 0
      %p40 = por %p38, %p39
      %p41 = scmp.ne.s32.totalorder %s27, %s28
      %p42 = scmp.eq.s32.totalorder %s20, 1
      %p43 = por %p41, %p42
      %p45 = scmp.ne.s32.totalorder %s28, %s44
      %p46 = scmp.eq.s32.totalorder %s20, 0
      %p47 = por %p45, %p46
      %s49 = sadd.s32 %s48, 1
      %p52 = scmp.eq.s32.totalorder %s14, 1
      %p53 = scmp.ne.s32.totalorder %s48, %s50
      %p54 = scmp.eq.s32.totalorder %s14, 0
      %p55 = por %p53, %p54
      %p56 = scmp.ne.s32.totalorder %s48, %s50
      %p57 = scmp.eq.s32.totalorder %s19, 1
      %p58 = por %p56, %p57
      %p59 = scmp.ne.s32.totalorder %s50, %s51
      %p60 = scmp.eq.s32.totalorder %s19, 0
      %p61 = por %p59, %p60
      %p62 = scmp.ne.s32.totalorder %s50, %s51
      %p63 = scmp.eq.s32.totalorder %s20, 1
      %p64 = por %p62, %p63
      %p66 = scmp.ne.s32.totalorder %s51, %s65
      %p67 = scmp.eq.s32.totalorder %s20, 0
      %p68 = por %p66, %p67
      %s70 = sadd.s32 %s69, 1
      %p73 = scmp.eq.s32.totalorder %s14, 1
      %p74 = scmp.ne.s32.totalorder %s69, %s71
      %p75 = scmp.eq.s32.totalorder %s14, 0
      %p76 = por %p74, %p75
      %p77 = scmp.ne.s32.totalorder %s69, %s71
      %p78 = scmp.eq.s32.totalorder %s19, 1
      %p79 = por %p77, %p78
      %p80 = scmp.ne.s32.totalorder %s71, %s72
      %p81 = scmp.eq.s32.totalorder %s19, 0
      %p82 = por %p80, %p81
      %p83 = scmp.ne.s32.totalorder %s71, %s72
      %p84 = scmp.eq.s32.totalorder %s20, 1
      %p85 = por %p83, %p84
      %p87 = scmp.ne.s32.totalorder %s72, %s86
      %p88 = scmp.eq.s32.totalorder %s20, 0
      %p89 = por %p87, %p88
      %s90 = ssub.s32 %s14, %s21
      %p91 = scmp.eq.s32.totalorder %s90, 0
      %s93 = sadd.s32 %s92, 1
      %s94 = scalar_select %p91, %s92, %s93
      %p97 = pneg %p91
      %p98 = scmp.eq.s32.totalorder %s14, 1
      %p99 = por %p97, %p98
      %p100 = scmp.ne.s32.totalorder %s92, %s95
      %p101 = scmp.eq.s32.totalorder %s14, 0
      %p102 = por %p100, %p101
      %p103 = scmp.ne.s32.totalorder %s92, %s95
      %p104 = scmp.eq.s32.totalorder %s19, 1
      %p105 = por %p103, %p104
      %p106 = scmp.ne.s32.totalorder %s95, %s96
      %p107 = scmp.eq.s32.totalorder %s19, 0
      %p108 = por %p106, %p107
      %p109 = scmp.ne.s32.totalorder %s95, %s96
      %p110 = scmp.eq.s32.totalorder %s20, 1
      %p111 = por %p109, %p110
      %p113 = scmp.ne.s32.totalorder %s96, %s112
      %p114 = scmp.eq.s32.totalorder %s20, 0
      %p115 = por %p113, %p114
      %p116 = scmp.le.s32.totalorder 1, %s14
      %p117 = scmp.lt.s32.totalorder %s14, 3
      %p118 = pnand %p116, %p117
      %p119 = pneg %p118
      // Predicated region
      $region9: #{tpu_custom_call.1} parent=5 // pred_check
        _
      $region10: #{tpu_custom_call.1} parent=5 // pred_check_branch
        %121 = sbr.rel (%p118) target = $region12
      $region11: #{tpu_custom_call.1} parent=5 // pred_region
        %s122 = ssub.s32 %s14, 1
        // Predicated region
        $region13: #{tpu_custom_call.1} parent=11 // pred_check
          %p123 = pneg %p61
        $region14: #{tpu_custom_call.1} parent=11 // pred_check_branch
          %125 = sbr.rel (%p123) target = $region16
        $region15: #{tpu_custom_call.1} parent=11 // pred_region
          %127 = vsyncadd [#allocation3], 0
          %s128 = sshll.u32 %s1, 4
          %s129 = int_to_ptr.hbm [resolvable:$true] %s128
          %s130 = sshll.u32 [#allocation2], 4
          %s131 = int_to_ptr.vmem [resolvable:$true] %s130
          %136 = dma.hbm_to_vmem [thread:$0]  %s129, 16384, %s131, [#allocation3], 256, 256, 16
        $region16: #{tpu_custom_call.1} parent=11 // pred_fallthru
          _
        // Predicated region
        $region17: #{tpu_custom_call.1} parent=11 // pred_check
          %p137 = pneg %p82
        $region18: #{tpu_custom_call.1} parent=11 // pred_check_branch
          %139 = sbr.rel (%p137) target = $region20
        $region19: #{tpu_custom_call.1} parent=11 // pred_region
          %141 = vsyncadd [#allocation6], 0
          %s142 = sshll.u32 %s2, 4
          %s143 = int_to_ptr.hbm [resolvable:$true] %s142
          %s144 = sshll.u32 [#allocation5], 4
          %s145 = int_to_ptr.vmem [resolvable:$true] %s144
          %150 = dma.hbm_to_vmem [thread:$0]  %s143, 5120, %s145, [#allocation6], 256, 256, 16
        $region20: #{tpu_custom_call.1} parent=11 // pred_fallthru
          _
      $region12: #{tpu_custom_call.1} parent=5 // pred_fallthru
        _
      %p151 = scmp.lt.s32.totalorder %s14, 2
      // Predicated region
      $region21: #{tpu_custom_call.1} parent=5 // pred_check
        %p152 = pneg %p151
      $region22: #{tpu_custom_call.1} parent=5 // pred_check_branch
        %154 = sbr.rel (%p152) target = $region24
      $region23: #{tpu_custom_call.1} parent=5 // pred_region
        // Predicated region
        $region25: #{tpu_custom_call.1} parent=23 // pred_check
          %p155 = pneg %p34
        $region26: #{tpu_custom_call.1} parent=23 // pred_check_branch
          %157 = sbr.rel (%p155) target = $region28
        $region27: #{tpu_custom_call.1} parent=23 // pred_region
          %p158 = scmp.lt.s32.totalorder %s14, 1
          %s159 = scalar_select %p158, %s14, 1
          %s160 = smul.addr %s159, 8
          %s161 = smul.addr %s160, 8
          %s162 = scalar_lea.vmem %s0, %s161
        $region28: #{tpu_custom_call.1} parent=23 // pred_fallthru
          _
      $region24: #{tpu_custom_call.1} parent=5 // pred_fallthru
        _
      %p163 = scmp.le.s32.totalorder 1, %s14
      %p164 = scmp.lt.s32.totalorder %s14, 3
      %p165 = pnand %p163, %p164
      %p166 = pneg %p165
      // Predicated region
      $region29: #{tpu_custom_call.1} parent=5 // pred_check
        _
      $region30: #{tpu_custom_call.1} parent=5 // pred_check_branch
        %168 = sbr.rel (%p165) target = $region32
      $region31: #{tpu_custom_call.1} parent=5 // pred_region
        %s169 = ssub.s32 %s14, 1
        // Predicated region
        $region33: #{tpu_custom_call.1} parent=31 // pred_check
          %p170 = pneg %p61
        $region34: #{tpu_custom_call.1} parent=31 // pred_check_branch
          %172 = sbr.rel (%p170) target = $region36
        $region35: #{tpu_custom_call.1} parent=31 // pred_region
          %174 = dma.done [#allocation3], 16384
        $region36: #{tpu_custom_call.1} parent=31 // pred_fallthru
          _
        // Predicated region
        $region37: #{tpu_custom_call.1} parent=31 // pred_check
          %p175 = pneg %p82
        $region38: #{tpu_custom_call.1} parent=31 // pred_check_branch
          %177 = sbr.rel (%p175) target = $region40
        $region39: #{tpu_custom_call.1} parent=31 // pred_region
          %179 = dma.done [#allocation6], 5120
        $region40: #{tpu_custom_call.1} parent=31 // pred_fallthru
          _
        %p180 = scmp.lt.s32.totalorder %s19, 1
        %s181 = scalar_select %p180, %s19, 1
        %s182 = smul.addr %s181, 8
        %s183 = smul.addr %s182, 8
        %s184 = scalar_lea.vmem %s0, %s183
        %p185 = pneg %p40
        %p186 = pneg %p37
        %p187 = pneg %p61
        %p188 = pneg %p58
        %p189 = pneg %p82
        %p190 = pneg %p79
        %p191 = pneg %p108
        %p192 = pneg %p105
        %s193 = sand.u32 %s95, 1
        %s194 = scalar_lea.sflag [#allocation4], %s193
        %s195 = sand.u32 %s95, 1
        %s196 = smul.addr %s195, 2
        %s197 = scalar_lea.vmem [#allocation7], %s196
        %p198 = scmp.lt.s32.totalorder %s19, 1
        %s199 = scalar_select %p198, %s19, 1
        %s200 = smul.addr %s199, 8
        %s201 = smul.addr %s200, 8
        %s202 = scalar_lea.vmem %s0, %s201
        %v203 = vld [vmem:[%s202] sm:$0xff]
        %v204 = vld [vmem:[%s202 + $0x8] sm:$0xff]
        %v205 = vld [vmem:[%s202 + $0x10] sm:$0xff]
        %v206 = vld [vmem:[%s202 + $0x18] sm:$0xff]
        %v207 = vld [vmem:[%s202 + $0x20] sm:$0xff]
        %v208 = vld [vmem:[%s202 + $0x28] sm:$0xff]
        %v209 = vld [vmem:[%s202 + $0x30] sm:$0xff]
        %v210 = vld [vmem:[%s202 + $0x38] sm:$0xff]
        %v211 = vld [vmem:[#allocation5] sm:$0xff]
        %v212 = vld [vmem:[#allocation5 + $0x8] sm:$0xff]
        %v213 = vld [vmem:[#allocation5 + $0x10] sm:$0xff]
        %v214 = vld [vmem:[#allocation5 + $0x18] sm:$0xff]
        %v215 = vld [vmem:[#allocation5 + $0x20] sm:$0xff]
        %v216 = vld [vmem:[#allocation5 + $0x28] sm:$0xff]
        %v217 = vld [vmem:[#allocation5 + $0x30] sm:$0xff]
        %v218 = vld [vmem:[#allocation5 + $0x38] sm:$0xff]
        %v219 = vld [vmem:[#allocation5 + $0x40] sm:$0xff]
        %v220 = vld [vmem:[#allocation5 + $0x48] sm:$0xff]
        %v221 = vld [vmem:[#allocation5 + $0x50] sm:$0xff]
        %v222 = vld [vmem:[#allocation5 + $0x58] sm:$0xff]
        %v223 = vld [vmem:[#allocation5 + $0x60] sm:$0xff]
        %v224 = vld [vmem:[#allocation5 + $0x68] sm:$0xff]
        %v225 = vld [vmem:[#allocation5 + $0x70] sm:$0xff]
        %v226 = vld [vmem:[#allocation5 + $0x78] sm:$0xff]
        %v227 = vld [vmem:[#allocation5 + $0x80] sm:$0xff]
        %v228 = vld [vmem:[#allocation5 + $0x88] sm:$0xff]
        %v229 = vld [vmem:[#allocation5 + $0x90] sm:$0xff]
        %v230 = vld [vmem:[#allocation5 + $0x98] sm:$0xff]
        %v231 = vld [vmem:[#allocation5 + $0xa0] sm:$0xff]
        %v232 = vld [vmem:[#allocation5 + $0xa8] sm:$0xff]
        %v233 = vld [vmem:[#allocation5 + $0xb0] sm:$0xff]
        %v234 = vld [vmem:[#allocation5 + $0xb8] sm:$0xff]
        %v235 = vld [vmem:[#allocation5 + $0xc0] sm:$0xff]
        %v236 = vld [vmem:[#allocation5 + $0xc8] sm:$0xff]
        %v237 = vld [vmem:[#allocation5 + $0xd0] sm:$0xff]
        %v238 = vld [vmem:[#allocation5 + $0xd8] sm:$0xff]
        %v239 = vld [vmem:[#allocation5 + $0xe0] sm:$0xff]
        %v240 = vld [vmem:[#allocation5 + $0xe8] sm:$0xff]
        %v241 = vld [vmem:[#allocation5 + $0xf0] sm:$0xff]
        %v242 = vld [vmem:[#allocation5 + $0xf8] sm:$0xff]
        %v243 = vld [vmem:[#allocation5 + $0x100] sm:$0xff]
        %v244 = vld [vmem:[#allocation5 + $0x108] sm:$0xff]
        %v245 = vld [vmem:[#allocation5 + $0x110] sm:$0xff]
        %v246 = vld [vmem:[#allocation5 + $0x118] sm:$0xff]
        %v247 = vld [vmem:[#allocation5 + $0x120] sm:$0xff]
        %v248 = vld [vmem:[#allocation5 + $0x128] sm:$0xff]
        %v249 = vld [vmem:[#allocation5 + $0x130] sm:$0xff]
        %v250 = vld [vmem:[#allocation5 + $0x138] sm:$0xff]
        %v251 = vmul.f32 %v203, %v203
        %v252 = vmul.f32 %v204, %v204
        %v253 = vmul.f32 %v205, %v205
        %v254 = vmul.f32 %v206, %v206
        %v255 = vmul.f32 %v207, %v207
        %v256 = vmul.f32 %v208, %v208
        %v257 = vmul.f32 %v209, %v209
        %v258 = vmul.f32 %v210, %v210
        %vm259 = vcmask 64512
        %v260 = vsel %vm259, %v251, 0.0
        %261 = vadd.xlane.f32.xlu0 %v260
        %v262 = vpop.xlane.xlu0 %261
        %v263 = vsel %vm259, %v252, 0.0
        %264 = vadd.xlane.f32.xlu0 %v263
        %v265 = vpop.xlane.xlu0 %264
        %v266 = vsel %vm259, %v253, 0.0
        %267 = vadd.xlane.f32.xlu0 %v266
        %v268 = vpop.xlane.xlu0 %267
        %v269 = vsel %vm259, %v254, 0.0
        %270 = vadd.xlane.f32.xlu0 %v269
        %v271 = vpop.xlane.xlu0 %270
        %v272 = vsel %vm259, %v255, 0.0
        %273 = vadd.xlane.f32.xlu0 %v272
        %v274 = vpop.xlane.xlu0 %273
        %v275 = vsel %vm259, %v256, 0.0
        %276 = vadd.xlane.f32.xlu0 %v275
        %v277 = vpop.xlane.xlu0 %276
        %v278 = vsel %vm259, %v257, 0.0
        %279 = vadd.xlane.f32.xlu0 %v278
        %v280 = vpop.xlane.xlu0 %279
        %v281 = vsel %vm259, %v258, 0.0
        %282 = vadd.xlane.f32.xlu0 %v281
        %v283 = vpop.xlane.xlu0 %282
        %v284 = vrsqrt.pop %v262
        %v285 = vmul.f32 %v284, %v262
        %v286 = vmul.f32 %v285, %v284
        %v287 = vmul.f32 0.5, %v286
        %v288 = vsub.f32 1.5, %v287
        %v289 = vmul.f32 %v284, %v288
        %vm290 = vweird.f32 %v262
        %vm291 = vweird.f32 %v284
        %vm292 = vmor %vm290, %vm291
        %v293 = vsel %vm292, %v284, %v289
        %v294 = vrsqrt.pop %v265
        %v295 = vmul.f32 %v294, %v265
        %v296 = vmul.f32 %v295, %v294
        %v297 = vmul.f32 0.5, %v296
        %v298 = vsub.f32 1.5, %v297
        %v299 = vmul.f32 %v294, %v298
        %vm300 = vweird.f32 %v265
        %vm301 = vweird.f32 %v294
        %vm302 = vmor %vm300, %vm301
        %v303 = vsel %vm302, %v294, %v299
        %v304 = vrsqrt.pop %v268
        %v305 = vmul.f32 %v304, %v268
        %v306 = vmul.f32 %v305, %v304
        %v307 = vmul.f32 0.5, %v306
        %v308 = vsub.f32 1.5, %v307
        %v309 = vmul.f32 %v304, %v308
        %vm310 = vweird.f32 %v268
        %vm311 = vweird.f32 %v304
        %vm312 = vmor %vm310, %vm311
        %v313 = vsel %vm312, %v304, %v309
        %v314 = vrsqrt.pop %v271
        %v315 = vmul.f32 %v314, %v271
        %v316 = vmul.f32 %v315, %v314
        %v317 = vmul.f32 0.5, %v316
        %v318 = vsub.f32 1.5, %v317
        %v319 = vmul.f32 %v314, %v318
        %vm320 = vweird.f32 %v271
        %vm321 = vweird.f32 %v314
        %vm322 = vmor %vm320, %vm321
        %v323 = vsel %vm322, %v314, %v319
        %v324 = vrsqrt.pop %v274
        %v325 = vmul.f32 %v324, %v274
        %v326 = vmul.f32 %v325, %v324
        %v327 = vmul.f32 0.5, %v326
        %v328 = vsub.f32 1.5, %v327
        %v329 = vmul.f32 %v324, %v328
        %vm330 = vweird.f32 %v274
        %vm331 = vweird.f32 %v324
        %vm332 = vmor %vm330, %vm331
        %v333 = vsel %vm332, %v324, %v329
        %v334 = vrsqrt.pop %v277
        %v335 = vmul.f32 %v334, %v277
        %v336 = vmul.f32 %v335, %v334
        %v337 = vmul.f32 0.5, %v336
        %v338 = vsub.f32 1.5, %v337
        %v339 = vmul.f32 %v334, %v338
        %vm340 = vweird.f32 %v277
        %vm341 = vweird.f32 %v334
        %vm342 = vmor %vm340, %vm341
        %v343 = vsel %vm342, %v334, %v339
        %v344 = vrsqrt.pop %v280
        %v345 = vmul.f32 %v344, %v280
        %v346 = vmul.f32 %v345, %v344
        %v347 = vmul.f32 0.5, %v346
        %v348 = vsub.f32 1.5, %v347
        %v349 = vmul.f32 %v344, %v348
        %vm350 = vweird.f32 %v280
        %vm351 = vweird.f32 %v344
        %vm352 = vmor %vm350, %vm351
        %v353 = vsel %vm352, %v344, %v349
        %v354 = vrsqrt.pop %v283
        %v355 = vmul.f32 %v354, %v283
        %v356 = vmul.f32 %v355, %v354
        %v357 = vmul.f32 0.5, %v356
        %v358 = vsub.f32 1.5, %v357
        %v359 = vmul.f32 %v354, %v358
        %vm360 = vweird.f32 %v283
        %vm361 = vweird.f32 %v354
        %vm362 = vmor %vm360, %vm361
        %v363 = vsel %vm362, %v354, %v359
        %v364 = vmul.f32 %v262, %v293
        %v365 = vmul.f32 %v265, %v303
        %v366 = vmul.f32 %v268, %v313
        %v367 = vmul.f32 %v271, %v323
        %v368 = vmul.f32 %v274, %v333
        %v369 = vmul.f32 %v277, %v343
        %v370 = vmul.f32 %v280, %v353
        %v371 = vmul.f32 %v283, %v363
        %v372 = vadd.f32 %v262, 1.0
        %v373 = vadd.f32 %v265, 1.0
        %v374 = vadd.f32 %v268, 1.0
        %v375 = vadd.f32 %v271, 1.0
        %v376 = vadd.f32 %v274, 1.0
        %v377 = vadd.f32 %v277, 1.0
        %v378 = vadd.f32 %v280, 1.0
        %v379 = vadd.f32 %v283, 1.0
        %v380 = vrcp.pop %v372
        %v381 = vmul.f32 %v372, %v380
        %v382 = vsub.f32 1.0, %v381
        %v383 = vmul.f32 %v380, %v382
        %v384 = vadd.f32 %v380, %v383
        %vm385 = vweird.f32 %v372
        %vm386 = vweird.f32 %v380
        %vm387 = vmor %vm385, %vm386
        %v388 = vsel %vm387, %v380, %v384
        %v389 = vand.u32 2147483647, %v372
        %vm390 = vcmp.eq.f32.partialorder %v389, 8.507059e+37
        %v391 = vand.u32 %v372, 2147483648
        %v392 = vor.u32 1.1754944e-38, %v391
        %v393 = vsel %vm390, %v392, %v388
        %v394 = vmul.f32 %v364, %v393
        %v395 = vrcp.pop %v373
        %v396 = vmul.f32 %v373, %v395
        %v397 = vsub.f32 1.0, %v396
        %v398 = vmul.f32 %v395, %v397
        %v399 = vadd.f32 %v395, %v398
        %vm400 = vweird.f32 %v373
        %vm401 = vweird.f32 %v395
        %vm402 = vmor %vm400, %vm401
        %v403 = vsel %vm402, %v395, %v399
        %v404 = vand.u32 2147483647, %v373
        %vm405 = vcmp.eq.f32.partialorder %v404, 8.507059e+37
        %v406 = vand.u32 %v373, 2147483648
        %v407 = vor.u32 1.1754944e-38, %v406
        %v408 = vsel %vm405, %v407, %v403
        %v409 = vmul.f32 %v365, %v408
        %v410 = vrcp.pop %v374
        %v411 = vmul.f32 %v374, %v410
        %v412 = vsub.f32 1.0, %v411
        %v413 = vmul.f32 %v410, %v412
        %v414 = vadd.f32 %v410, %v413
        %vm415 = vweird.f32 %v374
        %vm416 = vweird.f32 %v410
        %vm417 = vmor %vm415, %vm416
        %v418 = vsel %vm417, %v410, %v414
        %v419 = vand.u32 2147483647, %v374
        %vm420 = vcmp.eq.f32.partialorder %v419, 8.507059e+37
        %v421 = vand.u32 %v374, 2147483648
        %v422 = vor.u32 1.1754944e-38, %v421
        %v423 = vsel %vm420, %v422, %v418
        %v424 = vmul.f32 %v366, %v423
        %v425 = vrcp.pop %v375
        %v426 = vmul.f32 %v375, %v425
        %v427 = vsub.f32 1.0, %v426
        %v428 = vmul.f32 %v425, %v427
        %v429 = vadd.f32 %v425, %v428
        %vm430 = vweird.f32 %v375
        %vm431 = vweird.f32 %v425
        %vm432 = vmor %vm430, %vm431
        %v433 = vsel %vm432, %v425, %v429
        %v434 = vand.u32 2147483647, %v375
        %vm435 = vcmp.eq.f32.partialorder %v434, 8.507059e+37
        %v436 = vand.u32 %v375, 2147483648
        %v437 = vor.u32 1.1754944e-38, %v436
        %v438 = vsel %vm435, %v437, %v433
        %v439 = vmul.f32 %v367, %v438
        %v440 = vrcp.pop %v376
        %v441 = vmul.f32 %v376, %v440
        %v442 = vsub.f32 1.0, %v441
        %v443 = vmul.f32 %v440, %v442
        %v444 = vadd.f32 %v440, %v443
        %vm445 = vweird.f32 %v376
        %vm446 = vweird.f32 %v440
        %vm447 = vmor %vm445, %vm446
        %v448 = vsel %vm447, %v440, %v444
        %v449 = vand.u32 2147483647, %v376
        %vm450 = vcmp.eq.f32.partialorder %v449, 8.507059e+37
        %v451 = vand.u32 %v376, 2147483648
        %v452 = vor.u32 1.1754944e-38, %v451
        %v453 = vsel %vm450, %v452, %v448
        %v454 = vmul.f32 %v368, %v453
        %v455 = vrcp.pop %v377
        %v456 = vmul.f32 %v377, %v455
        %v457 = vsub.f32 1.0, %v456
        %v458 = vmul.f32 %v455, %v457
        %v459 = vadd.f32 %v455, %v458
        %vm460 = vweird.f32 %v377
        %vm461 = vweird.f32 %v455
        %vm462 = vmor %vm460, %vm461
        %v463 = vsel %vm462, %v455, %v459
        %v464 = vand.u32 2147483647, %v377
        %vm465 = vcmp.eq.f32.partialorder %v464, 8.507059e+37
        %v466 = vand.u32 %v377, 2147483648
        %v467 = vor.u32 1.1754944e-38, %v466
        %v468 = vsel %vm465, %v467, %v463
        %v469 = vmul.f32 %v369, %v468
        %v470 = vrcp.pop %v378
        %v471 = vmul.f32 %v378, %v470
        %v472 = vsub.f32 1.0, %v471
        %v473 = vmul.f32 %v470, %v472
        %v474 = vadd.f32 %v470, %v473
        %vm475 = vweird.f32 %v378
        %vm476 = vweird.f32 %v470
        %vm477 = vmor %vm475, %vm476
        %v478 = vsel %vm477, %v470, %v474
        %v479 = vand.u32 2147483647, %v378
        %vm480 = vcmp.eq.f32.partialorder %v479, 8.507059e+37
        %v481 = vand.u32 %v378, 2147483648
        %v482 = vor.u32 1.1754944e-38, %v481
        %v483 = vsel %vm480, %v482, %v478
        %v484 = vmul.f32 %v370, %v483
        %v485 = vrcp.pop %v379
        %v486 = vmul.f32 %v379, %v485
        %v487 = vsub.f32 1.0, %v486
        %v488 = vmul.f32 %v485, %v487
        %v489 = vadd.f32 %v485, %v488
        %vm490 = vweird.f32 %v379
        %vm491 = vweird.f32 %v485
        %vm492 = vmor %vm490, %vm491
        %v493 = vsel %vm492, %v485, %v489
        %v494 = vand.u32 2147483647, %v379
        %vm495 = vcmp.eq.f32.partialorder %v494, 8.507059e+37
        %v496 = vand.u32 %v379, 2147483648
        %v497 = vor.u32 1.1754944e-38, %v496
        %v498 = vsel %vm495, %v497, %v493
        %v499 = vmul.f32 %v371, %v498
        %v500 = vmul.f32 %v203, %v394
        %v501 = vmul.f32 %v204, %v409
        %v502 = vmul.f32 %v205, %v424
        %v503 = vmul.f32 %v206, %v439
        %v504 = vmul.f32 %v207, %v454
        %v505 = vmul.f32 %v208, %v469
        %v506 = vmul.f32 %v209, %v484
        %v507 = vmul.f32 %v210, %v499
        %v508 = vld [vmem:[#allocation2] sm:$0xff]
        %v509 = vld [vmem:[#allocation2 + $0x8] sm:$0xff]
        %v510 = vld [vmem:[#allocation2 + $0x10] sm:$0xff]
        %v511 = vld [vmem:[#allocation2 + $0x18] sm:$0xff]
        %v512 = vld [vmem:[#allocation2 + $0x20] sm:$0xff]
        %v513 = vld [vmem:[#allocation2 + $0x28] sm:$0xff]
        %v514 = vld [vmem:[#allocation2 + $0x30] sm:$0xff]
        %v515 = vld [vmem:[#allocation2 + $0x38] sm:$0xff]
        %v516 = vld [vmem:[#allocation2 + $0x40] sm:$0xff]
        %v517 = vld [vmem:[#allocation2 + $0x48] sm:$0xff]
        %v518 = vld [vmem:[#allocation2 + $0x50] sm:$0xff]
        %v519 = vld [vmem:[#allocation2 + $0x58] sm:$0xff]
        %v520 = vld [vmem:[#allocation2 + $0x60] sm:$0xff]
        %v521 = vld [vmem:[#allocation2 + $0x68] sm:$0xff]
        %v522 = vld [vmem:[#allocation2 + $0x70] sm:$0xff]
        %v523 = vld [vmem:[#allocation2 + $0x78] sm:$0xff]
        %525 = vset.pattern.permute.xlu0 0
        %526 = vperm.xlu0 %525, %v500
        %v527 = vpop.permute.xlu0 %526
        %530 = vset.pattern.permute.xlu0 0
        %531 = vperm.xlu0 %530, %v501
        %v532 = vpop.permute.xlu0 %531
        %535 = vset.pattern.permute.xlu0 0
        %536 = vperm.xlu0 %535, %v502
        %v537 = vpop.permute.xlu0 %536
        %540 = vset.pattern.permute.xlu0 0
        %541 = vperm.xlu0 %540, %v503
        %v542 = vpop.permute.xlu0 %541
        %545 = vset.pattern.permute.xlu0 0
        %546 = vperm.xlu0 %545, %v504
        %v547 = vpop.permute.xlu0 %546
        %550 = vset.pattern.permute.xlu0 0
        %551 = vperm.xlu0 %550, %v505
        %v552 = vpop.permute.xlu0 %551
        %555 = vset.pattern.permute.xlu0 0
        %556 = vperm.xlu0 %555, %v506
        %v557 = vpop.permute.xlu0 %556
        %560 = vset.pattern.permute.xlu0 0
        %561 = vperm.xlu0 %560, %v507
        %v562 = vpop.permute.xlu0 %561
        %v564 = vmul.f32 %v527, %v508
        %v565 = vmul.f32 %v527, %v509
        %v566 = vmul.f32 %v532, %v510
        %v567 = vmul.f32 %v532, %v511
        %v568 = vmul.f32 %v537, %v512
        %v569 = vmul.f32 %v537, %v513
        %v570 = vmul.f32 %v542, %v514
        %v571 = vmul.f32 %v542, %v515
        %v572 = vmul.f32 %v547, %v516
        %v573 = vmul.f32 %v547, %v517
        %v574 = vmul.f32 %v552, %v518
        %v575 = vmul.f32 %v552, %v519
        %v576 = vmul.f32 %v557, %v520
        %v577 = vmul.f32 %v557, %v521
        %v578 = vmul.f32 %v562, %v522
        %v579 = vmul.f32 %v562, %v523
        %s580 = scalar_lea.vmem [#allocation2], 128
        %v581 = vld [vmem:[%s580] sm:$0xff]
        %v582 = vld [vmem:[%s580 + $0x8] sm:$0xff]
        %v583 = vld [vmem:[%s580 + $0x10] sm:$0xff]
        %v584 = vld [vmem:[%s580 + $0x18] sm:$0xff]
        %v585 = vld [vmem:[%s580 + $0x20] sm:$0xff]
        %v586 = vld [vmem:[%s580 + $0x28] sm:$0xff]
        %v587 = vld [vmem:[%s580 + $0x30] sm:$0xff]
        %v588 = vld [vmem:[%s580 + $0x38] sm:$0xff]
        %v589 = vld [vmem:[%s580 + $0x40] sm:$0xff]
        %v590 = vld [vmem:[%s580 + $0x48] sm:$0xff]
        %v591 = vld [vmem:[%s580 + $0x50] sm:$0xff]
        %v592 = vld [vmem:[%s580 + $0x58] sm:$0xff]
        %v593 = vld [vmem:[%s580 + $0x60] sm:$0xff]
        %v594 = vld [vmem:[%s580 + $0x68] sm:$0xff]
        %v595 = vld [vmem:[%s580 + $0x70] sm:$0xff]
        %v596 = vld [vmem:[%s580 + $0x78] sm:$0xff]
        %597 = vset.pattern.permute.xlu0 1
        %598 = vperm.xlu0 %597, %v500
        %v599 = vpop.permute.xlu0 %598
        %601 = vset.pattern.permute.xlu0 1
        %602 = vperm.xlu0 %601, %v501
        %v603 = vpop.permute.xlu0 %602
        %605 = vset.pattern.permute.xlu0 1
        %606 = vperm.xlu0 %605, %v502
        %v607 = vpop.permute.xlu0 %606
        %609 = vset.pattern.permute.xlu0 1
        %610 = vperm.xlu0 %609, %v503
        %v611 = vpop.permute.xlu0 %610
        %613 = vset.pattern.permute.xlu0 1
        %614 = vperm.xlu0 %613, %v504
        %v615 = vpop.permute.xlu0 %614
        %617 = vset.pattern.permute.xlu0 1
        %618 = vperm.xlu0 %617, %v505
        %v619 = vpop.permute.xlu0 %618
        %621 = vset.pattern.permute.xlu0 1
        %622 = vperm.xlu0 %621, %v506
        %v623 = vpop.permute.xlu0 %622
        %625 = vset.pattern.permute.xlu0 1
        %626 = vperm.xlu0 %625, %v507
        %v627 = vpop.permute.xlu0 %626
        %v629 = vmul.f32 %v599, %v581
        %v630 = vmul.f32 %v599, %v582
        %v631 = vmul.f32 %v603, %v583
        %v632 = vmul.f32 %v603, %v584
        %v633 = vmul.f32 %v607, %v585
        %v634 = vmul.f32 %v607, %v586
        %v635 = vmul.f32 %v611, %v587
        %v636 = vmul.f32 %v611, %v588
        %v637 = vmul.f32 %v615, %v589
        %v638 = vmul.f32 %v615, %v590
        %v639 = vmul.f32 %v619, %v591
        %v640 = vmul.f32 %v619, %v592
        %v641 = vmul.f32 %v623, %v593
        %v642 = vmul.f32 %v623, %v594
        %v643 = vmul.f32 %v627, %v595
        %v644 = vmul.f32 %v627, %v596
        %v645 = vadd.f32 %v564, %v629
        %v646 = vadd.f32 %v565, %v630
        %v647 = vadd.f32 %v566, %v631
        %v648 = vadd.f32 %v567, %v632
        %v649 = vadd.f32 %v568, %v633
        %v650 = vadd.f32 %v569, %v634
        %v651 = vadd.f32 %v570, %v635
        %v652 = vadd.f32 %v571, %v636
        %v653 = vadd.f32 %v572, %v637
        %v654 = vadd.f32 %v573, %v638
        %v655 = vadd.f32 %v574, %v639
        %v656 = vadd.f32 %v575, %v640
        %v657 = vadd.f32 %v576, %v641
        %v658 = vadd.f32 %v577, %v642
        %v659 = vadd.f32 %v578, %v643
        %v660 = vadd.f32 %v579, %v644
        %s661 = scalar_lea.vmem [#allocation2], 256
        %v662 = vld [vmem:[%s661] sm:$0xff]
        %v663 = vld [vmem:[%s661 + $0x8] sm:$0xff]
        %v664 = vld [vmem:[%s661 + $0x10] sm:$0xff]
        %v665 = vld [vmem:[%s661 + $0x18] sm:$0xff]
        %v666 = vld [vmem:[%s661 + $0x20] sm:$0xff]
        %v667 = vld [vmem:[%s661 + $0x28] sm:$0xff]
        %v668 = vld [vmem:[%s661 + $0x30] sm:$0xff]
        %v669 = vld [vmem:[%s661 + $0x38] sm:$0xff]
        %v670 = vld [vmem:[%s661 + $0x40] sm:$0xff]
        %v671 = vld [vmem:[%s661 + $0x48] sm:$0xff]
        %v672 = vld [vmem:[%s661 + $0x50] sm:$0xff]
        %v673 = vld [vmem:[%s661 + $0x58] sm:$0xff]
        %v674 = vld [vmem:[%s661 + $0x60] sm:$0xff]
        %v675 = vld [vmem:[%s661 + $0x68] sm:$0xff]
        %v676 = vld [vmem:[%s661 + $0x70] sm:$0xff]
        %v677 = vld [vmem:[%s661 + $0x78] sm:$0xff]
        %678 = vset.pattern.permute.xlu0 2
        %679 = vperm.xlu0 %678, %v500
        %v680 = vpop.permute.xlu0 %679
        %682 = vset.pattern.permute.xlu0 2
        %683 = vperm.xlu0 %682, %v501
        %v684 = vpop.permute.xlu0 %683
        %686 = vset.pattern.permute.xlu0 2
        %687 = vperm.xlu0 %686, %v502
        %v688 = vpop.permute.xlu0 %687
        %690 = vset.pattern.permute.xlu0 2
        %691 = vperm.xlu0 %690, %v503
        %v692 = vpop.permute.xlu0 %691
        %694 = vset.pattern.permute.xlu0 2
        %695 = vperm.xlu0 %694, %v504
        %v696 = vpop.permute.xlu0 %695
        %698 = vset.pattern.permute.xlu0 2
        %699 = vperm.xlu0 %698, %v505
        %v700 = vpop.permute.xlu0 %699
        %702 = vset.pattern.permute.xlu0 2
        %703 = vperm.xlu0 %702, %v506
        %v704 = vpop.permute.xlu0 %703
        %706 = vset.pattern.permute.xlu0 2
        %707 = vperm.xlu0 %706, %v507
        %v708 = vpop.permute.xlu0 %707
        %v710 = vmul.f32 %v680, %v662
        %v711 = vmul.f32 %v680, %v663
        %v712 = vmul.f32 %v684, %v664
        %v713 = vmul.f32 %v684, %v665
        %v714 = vmul.f32 %v688, %v666
        %v715 = vmul.f32 %v688, %v667
        %v716 = vmul.f32 %v692, %v668
        %v717 = vmul.f32 %v692, %v669
        %v718 = vmul.f32 %v696, %v670
        %v719 = vmul.f32 %v696, %v671
        %v720 = vmul.f32 %v700, %v672
        %v721 = vmul.f32 %v700, %v673
        %v722 = vmul.f32 %v704, %v674
        %v723 = vmul.f32 %v704, %v675
        %v724 = vmul.f32 %v708, %v676
        %v725 = vmul.f32 %v708, %v677
        %v726 = vadd.f32 %v645, %v710
        %v727 = vadd.f32 %v646, %v711
        %v728 = vadd.f32 %v647, %v712
        %v729 = vadd.f32 %v648, %v713
        %v730 = vadd.f32 %v649, %v714
        %v731 = vadd.f32 %v650, %v715
        %v732 = vadd.f32 %v651, %v716
        %v733 = vadd.f32 %v652, %v717
        %v734 = vadd.f32 %v653, %v718
        %v735 = vadd.f32 %v654, %v719
        %v736 = vadd.f32 %v655, %v720
        %v737 = vadd.f32 %v656, %v721
        %v738 = vadd.f32 %v657, %v722
        %v739 = vadd.f32 %v658, %v723
        %v740 = vadd.f32 %v659, %v724
        %v741 = vadd.f32 %v660, %v725
        %s742 = scalar_lea.vmem [#allocation2], 384
        %v743 = vld [vmem:[%s742] sm:$0xff]
        %v744 = vld [vmem:[%s742 + $0x8] sm:$0xff]
        %v745 = vld [vmem:[%s742 + $0x10] sm:$0xff]
        %v746 = vld [vmem:[%s742 + $0x18] sm:$0xff]
        %v747 = vld [vmem:[%s742 + $0x20] sm:$0xff]
        %v748 = vld [vmem:[%s742 + $0x28] sm:$0xff]
        %v749 = vld [vmem:[%s742 + $0x30] sm:$0xff]
        %v750 = vld [vmem:[%s742 + $0x38] sm:$0xff]
        %v751 = vld [vmem:[%s742 + $0x40] sm:$0xff]
        %v752 = vld [vmem:[%s742 + $0x48] sm:$0xff]
        %v753 = vld [vmem:[%s742 + $0x50] sm:$0xff]
        %v754 = vld [vmem:[%s742 + $0x58] sm:$0xff]
        %v755 = vld [vmem:[%s742 + $0x60] sm:$0xff]
        %v756 = vld [vmem:[%s742 + $0x68] sm:$0xff]
        %v757 = vld [vmem:[%s742 + $0x70] sm:$0xff]
        %v758 = vld [vmem:[%s742 + $0x78] sm:$0xff]
        %759 = vset.pattern.permute.xlu0 3
        %760 = vperm.xlu0 %759, %v500
        %v761 = vpop.permute.xlu0 %760
        %763 = vset.pattern.permute.xlu0 3
        %764 = vperm.xlu0 %763, %v501
        %v765 = vpop.permute.xlu0 %764
        %767 = vset.pattern.permute.xlu0 3
        %768 = vperm.xlu0 %767, %v502
        %v769 = vpop.permute.xlu0 %768
        %771 = vset.pattern.permute.xlu0 3
        %772 = vperm.xlu0 %771, %v503
        %v773 = vpop.permute.xlu0 %772
        %775 = vset.pattern.permute.xlu0 3
        %776 = vperm.xlu0 %775, %v504
        %v777 = vpop.permute.xlu0 %776
        %779 = vset.pattern.permute.xlu0 3
        %780 = vperm.xlu0 %779, %v505
        %v781 = vpop.permute.xlu0 %780
        %783 = vset.pattern.permute.xlu0 3
        %784 = vperm.xlu0 %783, %v506
        %v785 = vpop.permute.xlu0 %784
        %787 = vset.pattern.permute.xlu0 3
        %788 = vperm.xlu0 %787, %v507
        %v789 = vpop.permute.xlu0 %788
        %v791 = vmul.f32 %v761, %v743
        %v792 = vmul.f32 %v761, %v744
        %v793 = vmul.f32 %v765, %v745
        %v794 = vmul.f32 %v765, %v746
        %v795 = vmul.f32 %v769, %v747
        %v796 = vmul.f32 %v769, %v748
        %v797 = vmul.f32 %v773, %v749
        %v798 = vmul.f32 %v773, %v750
        %v799 = vmul.f32 %v777, %v751
        %v800 = vmul.f32 %v777, %v752
        %v801 = vmul.f32 %v781, %v753
        %v802 = vmul.f32 %v781, %v754
        %v803 = vmul.f32 %v785, %v755
        %v804 = vmul.f32 %v785, %v756
        %v805 = vmul.f32 %v789, %v757
        %v806 = vmul.f32 %v789, %v758
        %v807 = vadd.f32 %v726, %v791
        %v808 = vadd.f32 %v727, %v792
        %v809 = vadd.f32 %v728, %v793
        %v810 = vadd.f32 %v729, %v794
        %v811 = vadd.f32 %v730, %v795
        %v812 = vadd.f32 %v731, %v796
        %v813 = vadd.f32 %v732, %v797
        %v814 = vadd.f32 %v733, %v798
        %v815 = vadd.f32 %v734, %v799
        %v816 = vadd.f32 %v735, %v800
        %v817 = vadd.f32 %v736, %v801
        %v818 = vadd.f32 %v737, %v802
        %v819 = vadd.f32 %v738, %v803
        %v820 = vadd.f32 %v739, %v804
        %v821 = vadd.f32 %v740, %v805
        %v822 = vadd.f32 %v741, %v806
        %s823 = scalar_lea.vmem [#allocation2], 512
        %v824 = vld [vmem:[%s823] sm:$0xff]
        %v825 = vld [vmem:[%s823 + $0x8] sm:$0xff]
        %v826 = vld [vmem:[%s823 + $0x10] sm:$0xff]
        %v827 = vld [vmem:[%s823 + $0x18] sm:$0xff]
        %v828 = vld [vmem:[%s823 + $0x20] sm:$0xff]
        %v829 = vld [vmem:[%s823 + $0x28] sm:$0xff]
        %v830 = vld [vmem:[%s823 + $0x30] sm:$0xff]
        %v831 = vld [vmem:[%s823 + $0x38] sm:$0xff]
        %v832 = vld [vmem:[%s823 + $0x40] sm:$0xff]
        %v833 = vld [vmem:[%s823 + $0x48] sm:$0xff]
        %v834 = vld [vmem:[%s823 + $0x50] sm:$0xff]
        %v835 = vld [vmem:[%s823 + $0x58] sm:$0xff]
        %v836 = vld [vmem:[%s823 + $0x60] sm:$0xff]
        %v837 = vld [vmem:[%s823 + $0x68] sm:$0xff]
        %v838 = vld [vmem:[%s823 + $0x70] sm:$0xff]
        %v839 = vld [vmem:[%s823 + $0x78] sm:$0xff]
        %840 = vset.pattern.permute.xlu0 4
        %841 = vperm.xlu0 %840, %v500
        %v842 = vpop.permute.xlu0 %841
        %844 = vset.pattern.permute.xlu0 4
        %845 = vperm.xlu0 %844, %v501
        %v846 = vpop.permute.xlu0 %845
        %848 = vset.pattern.permute.xlu0 4
        %849 = vperm.xlu0 %848, %v502
        %v850 = vpop.permute.xlu0 %849
        %852 = vset.pattern.permute.xlu0 4
        %853 = vperm.xlu0 %852, %v503
        %v854 = vpop.permute.xlu0 %853
        %856 = vset.pattern.permute.xlu0 4
        %857 = vperm.xlu0 %856, %v504
        %v858 = vpop.permute.xlu0 %857
        %860 = vset.pattern.permute.xlu0 4
        %861 = vperm.xlu0 %860, %v505
        %v862 = vpop.permute.xlu0 %861
        %864 = vset.pattern.permute.xlu0 4
        %865 = vperm.xlu0 %864, %v506
        %v866 = vpop.permute.xlu0 %865
        %868 = vset.pattern.permute.xlu0 4
        %869 = vperm.xlu0 %868, %v507
        %v870 = vpop.permute.xlu0 %869
        %v872 = vmul.f32 %v842, %v824
        %v873 = vmul.f32 %v842, %v825
        %v874 = vmul.f32 %v846, %v826
        %v875 = vmul.f32 %v846, %v827
        %v876 = vmul.f32 %v850, %v828
        %v877 = vmul.f32 %v850, %v829
        %v878 = vmul.f32 %v854, %v830
        %v879 = vmul.f32 %v854, %v831
        %v880 = vmul.f32 %v858, %v832
        %v881 = vmul.f32 %v858, %v833
        %v882 = vmul.f32 %v862, %v834
        %v883 = vmul.f32 %v862, %v835
        %v884 = vmul.f32 %v866, %v836
        %v885 = vmul.f32 %v866, %v837
        %v886 = vmul.f32 %v870, %v838
        %v887 = vmul.f32 %v870, %v839
        %v888 = vadd.f32 %v807, %v872
        %v889 = vadd.f32 %v808, %v873
        %v890 = vadd.f32 %v809, %v874
        %v891 = vadd.f32 %v810, %v875
        %v892 = vadd.f32 %v811, %v876
        %v893 = vadd.f32 %v812, %v877
        %v894 = vadd.f32 %v813, %v878
        %v895 = vadd.f32 %v814, %v879
        %v896 = vadd.f32 %v815, %v880
        %v897 = vadd.f32 %v816, %v881
        %v898 = vadd.f32 %v817, %v882
        %v899 = vadd.f32 %v818, %v883
        %v900 = vadd.f32 %v819, %v884
        %v901 = vadd.f32 %v820, %v885
        %v902 = vadd.f32 %v821, %v886
        %v903 = vadd.f32 %v822, %v887
        %s904 = scalar_lea.vmem [#allocation2], 640
        %v905 = vld [vmem:[%s904] sm:$0xff]
        %v906 = vld [vmem:[%s904 + $0x8] sm:$0xff]
        %v907 = vld [vmem:[%s904 + $0x10] sm:$0xff]
        %v908 = vld [vmem:[%s904 + $0x18] sm:$0xff]
        %v909 = vld [vmem:[%s904 + $0x20] sm:$0xff]
        %v910 = vld [vmem:[%s904 + $0x28] sm:$0xff]
        %v911 = vld [vmem:[%s904 + $0x30] sm:$0xff]
        %v912 = vld [vmem:[%s904 + $0x38] sm:$0xff]
        %v913 = vld [vmem:[%s904 + $0x40] sm:$0xff]
        %v914 = vld [vmem:[%s904 + $0x48] sm:$0xff]
        %v915 = vld [vmem:[%s904 + $0x50] sm:$0xff]
        %v916 = vld [vmem:[%s904 + $0x58] sm:$0xff]
        %v917 = vld [vmem:[%s904 + $0x60] sm:$0xff]
        %v918 = vld [vmem:[%s904 + $0x68] sm:$0xff]
        %v919 = vld [vmem:[%s904 + $0x70] sm:$0xff]
        %v920 = vld [vmem:[%s904 + $0x78] sm:$0xff]
        %921 = vset.pattern.permute.xlu0 5
        %922 = vperm.xlu0 %921, %v500
        %v923 = vpop.permute.xlu0 %922
        %925 = vset.pattern.permute.xlu0 5
        %926 = vperm.xlu0 %925, %v501
        %v927 = vpop.permute.xlu0 %926
        %929 = vset.pattern.permute.xlu0 5
        %930 = vperm.xlu0 %929, %v502
        %v931 = vpop.permute.xlu0 %930
        %933 = vset.pattern.permute.xlu0 5
        %934 = vperm.xlu0 %933, %v503
        %v935 = vpop.permute.xlu0 %934
        %937 = vset.pattern.permute.xlu0 5
        %938 = vperm.xlu0 %937, %v504
        %v939 = vpop.permute.xlu0 %938
        %941 = vset.pattern.permute.xlu0 5
        %942 = vperm.xlu0 %941, %v505
        %v943 = vpop.permute.xlu0 %942
        %945 = vset.pattern.permute.xlu0 5
        %946 = vperm.xlu0 %945, %v506
        %v947 = vpop.permute.xlu0 %946
        %949 = vset.pattern.permute.xlu0 5
        %950 = vperm.xlu0 %949, %v507
        %v951 = vpop.permute.xlu0 %950
        %v953 = vmul.f32 %v923, %v905
        %v954 = vmul.f32 %v923, %v906
        %v955 = vmul.f32 %v927, %v907
        %v956 = vmul.f32 %v927, %v908
        %v957 = vmul.f32 %v931, %v909
        %v958 = vmul.f32 %v931, %v910
        %v959 = vmul.f32 %v935, %v911
        %v960 = vmul.f32 %v935, %v912
        %v961 = vmul.f32 %v939, %v913
        %v962 = vmul.f32 %v939, %v914
        %v963 = vmul.f32 %v943, %v915
        %v964 = vmul.f32 %v943, %v916
        %v965 = vmul.f32 %v947, %v917
        %v966 = vmul.f32 %v947, %v918
        %v967 = vmul.f32 %v951, %v919
        %v968 = vmul.f32 %v951, %v920
        %v969 = vadd.f32 %v888, %v953
        %v970 = vadd.f32 %v889, %v954
        %v971 = vadd.f32 %v890, %v955
        %v972 = vadd.f32 %v891, %v956
        %v973 = vadd.f32 %v892, %v957
        %v974 = vadd.f32 %v893, %v958
        %v975 = vadd.f32 %v894, %v959
        %v976 = vadd.f32 %v895, %v960
        %v977 = vadd.f32 %v896, %v961
        %v978 = vadd.f32 %v897, %v962
        %v979 = vadd.f32 %v898, %v963
        %v980 = vadd.f32 %v899, %v964
        %v981 = vadd.f32 %v900, %v965
        %v982 = vadd.f32 %v901, %v966
        %v983 = vadd.f32 %v902, %v967
        %v984 = vadd.f32 %v903, %v968
        %s985 = scalar_lea.vmem [#allocation2], 768
        %v986 = vld [vmem:[%s985] sm:$0xff]
        %v987 = vld [vmem:[%s985 + $0x8] sm:$0xff]
        %v988 = vld [vmem:[%s985 + $0x10] sm:$0xff]
        %v989 = vld [vmem:[%s985 + $0x18] sm:$0xff]
        %v990 = vld [vmem:[%s985 + $0x20] sm:$0xff]
        %v991 = vld [vmem:[%s985 + $0x28] sm:$0xff]
        %v992 = vld [vmem:[%s985 + $0x30] sm:$0xff]
        %v993 = vld [vmem:[%s985 + $0x38] sm:$0xff]
        %v994 = vld [vmem:[%s985 + $0x40] sm:$0xff]
        %v995 = vld [vmem:[%s985 + $0x48] sm:$0xff]
        %v996 = vld [vmem:[%s985 + $0x50] sm:$0xff]
        %v997 = vld [vmem:[%s985 + $0x58] sm:$0xff]
        %v998 = vld [vmem:[%s985 + $0x60] sm:$0xff]
        %v999 = vld [vmem:[%s985 + $0x68] sm:$0xff]
        %v1000 = vld [vmem:[%s985 + $0x70] sm:$0xff]
        %v1001 = vld [vmem:[%s985 + $0x78] sm:$0xff]
        %1002 = vset.pattern.permute.xlu0 6
        %1003 = vperm.xlu0 %1002, %v500
        %v1004 = vpop.permute.xlu0 %1003
        %1006 = vset.pattern.permute.xlu0 6
        %1007 = vperm.xlu0 %1006, %v501
        %v1008 = vpop.permute.xlu0 %1007
        %1010 = vset.pattern.permute.xlu0 6
        %1011 = vperm.xlu0 %1010, %v502
        %v1012 = vpop.permute.xlu0 %1011
        %1014 = vset.pattern.permute.xlu0 6
        %1015 = vperm.xlu0 %1014, %v503
        %v1016 = vpop.permute.xlu0 %1015
        %1018 = vset.pattern.permute.xlu0 6
        %1019 = vperm.xlu0 %1018, %v504
        %v1020 = vpop.permute.xlu0 %1019
        %1022 = vset.pattern.permute.xlu0 6
        %1023 = vperm.xlu0 %1022, %v505
        %v1024 = vpop.permute.xlu0 %1023
        %1026 = vset.pattern.permute.xlu0 6
        %1027 = vperm.xlu0 %1026, %v506
        %v1028 = vpop.permute.xlu0 %1027
        %1030 = vset.pattern.permute.xlu0 6
        %1031 = vperm.xlu0 %1030, %v507
        %v1032 = vpop.permute.xlu0 %1031
        %v1034 = vmul.f32 %v1004, %v986
        %v1035 = vmul.f32 %v1004, %v987
        %v1036 = vmul.f32 %v1008, %v988
        %v1037 = vmul.f32 %v1008, %v989
        %v1038 = vmul.f32 %v1012, %v990
        %v1039 = vmul.f32 %v1012, %v991
        %v1040 = vmul.f32 %v1016, %v992
        %v1041 = vmul.f32 %v1016, %v993
        %v1042 = vmul.f32 %v1020, %v994
        %v1043 = vmul.f32 %v1020, %v995
        %v1044 = vmul.f32 %v1024, %v996
        %v1045 = vmul.f32 %v1024, %v997
        %v1046 = vmul.f32 %v1028, %v998
        %v1047 = vmul.f32 %v1028, %v999
        %v1048 = vmul.f32 %v1032, %v1000
        %v1049 = vmul.f32 %v1032, %v1001
        %v1050 = vadd.f32 %v969, %v1034
        %v1051 = vadd.f32 %v970, %v1035
        %v1052 = vadd.f32 %v971, %v1036
        %v1053 = vadd.f32 %v972, %v1037
        %v1054 = vadd.f32 %v973, %v1038
        %v1055 = vadd.f32 %v974, %v1039
        %v1056 = vadd.f32 %v975, %v1040
        %v1057 = vadd.f32 %v976, %v1041
        %v1058 = vadd.f32 %v977, %v1042
        %v1059 = vadd.f32 %v978, %v1043
        %v1060 = vadd.f32 %v979, %v1044
        %v1061 = vadd.f32 %v980, %v1045
        %v1062 = vadd.f32 %v981, %v1046
        %v1063 = vadd.f32 %v982, %v1047
        %v1064 = vadd.f32 %v983, %v1048
        %v1065 = vadd.f32 %v984, %v1049
        %s1066 = scalar_lea.vmem [#allocation2], 896
        %v1067 = vld [vmem:[%s1066] sm:$0xff]
        %v1068 = vld [vmem:[%s1066 + $0x8] sm:$0xff]
        %v1069 = vld [vmem:[%s1066 + $0x10] sm:$0xff]
        %v1070 = vld [vmem:[%s1066 + $0x18] sm:$0xff]
        %v1071 = vld [vmem:[%s1066 + $0x20] sm:$0xff]
        %v1072 = vld [vmem:[%s1066 + $0x28] sm:$0xff]
        %v1073 = vld [vmem:[%s1066 + $0x30] sm:$0xff]
        %v1074 = vld [vmem:[%s1066 + $0x38] sm:$0xff]
        %v1075 = vld [vmem:[%s1066 + $0x40] sm:$0xff]
        %v1076 = vld [vmem:[%s1066 + $0x48] sm:$0xff]
        %v1077 = vld [vmem:[%s1066 + $0x50] sm:$0xff]
        %v1078 = vld [vmem:[%s1066 + $0x58] sm:$0xff]
        %v1079 = vld [vmem:[%s1066 + $0x60] sm:$0xff]
        %v1080 = vld [vmem:[%s1066 + $0x68] sm:$0xff]
        %v1081 = vld [vmem:[%s1066 + $0x70] sm:$0xff]
        %v1082 = vld [vmem:[%s1066 + $0x78] sm:$0xff]
        %1083 = vset.pattern.permute.xlu0 7
        %1084 = vperm.xlu0 %1083, %v500
        %v1085 = vpop.permute.xlu0 %1084
        %1087 = vset.pattern.permute.xlu0 7
        %1088 = vperm.xlu0 %1087, %v501
        %v1089 = vpop.permute.xlu0 %1088
        %1091 = vset.pattern.permute.xlu0 7
        %1092 = vperm.xlu0 %1091, %v502
        %v1093 = vpop.permute.xlu0 %1092
        %1095 = vset.pattern.permute.xlu0 7
        %1096 = vperm.xlu0 %1095, %v503
        %v1097 = vpop.permute.xlu0 %1096
        %1099 = vset.pattern.permute.xlu0 7
        %1100 = vperm.xlu0 %1099, %v504
        %v1101 = vpop.permute.xlu0 %1100
        %1103 = vset.pattern.permute.xlu0 7
        %1104 = vperm.xlu0 %1103, %v505
        %v1105 = vpop.permute.xlu0 %1104
        %1107 = vset.pattern.permute.xlu0 7
        %1108 = vperm.xlu0 %1107, %v506
        %v1109 = vpop.permute.xlu0 %1108
        %1111 = vset.pattern.permute.xlu0 7
        %1112 = vperm.xlu0 %1111, %v507
        %v1113 = vpop.permute.xlu0 %1112
        %v1115 = vmul.f32 %v1085, %v1067
        %v1116 = vmul.f32 %v1085, %v1068
        %v1117 = vmul.f32 %v1089, %v1069
        %v1118 = vmul.f32 %v1089, %v1070
        %v1119 = vmul.f32 %v1093, %v1071
        %v1120 = vmul.f32 %v1093, %v1072
        %v1121 = vmul.f32 %v1097, %v1073
        %v1122 = vmul.f32 %v1097, %v1074
        %v1123 = vmul.f32 %v1101, %v1075
        %v1124 = vmul.f32 %v1101, %v1076
        %v1125 = vmul.f32 %v1105, %v1077
        %v1126 = vmul.f32 %v1105, %v1078
        %v1127 = vmul.f32 %v1109, %v1079
        %v1128 = vmul.f32 %v1109, %v1080
        %v1129 = vmul.f32 %v1113, %v1081
        %v1130 = vmul.f32 %v1113, %v1082
        %v1131 = vadd.f32 %v1050, %v1115
        %v1132 = vadd.f32 %v1051, %v1116
        %v1133 = vadd.f32 %v1052, %v1117
        %v1134 = vadd.f32 %v1053, %v1118
        %v1135 = vadd.f32 %v1054, %v1119
        %v1136 = vadd.f32 %v1055, %v1120
        %v1137 = vadd.f32 %v1056, %v1121
        %v1138 = vadd.f32 %v1057, %v1122
        %v1139 = vadd.f32 %v1058, %v1123
        %v1140 = vadd.f32 %v1059, %v1124
        %v1141 = vadd.f32 %v1060, %v1125
        %v1142 = vadd.f32 %v1061, %v1126
        %v1143 = vadd.f32 %v1062, %v1127
        %v1144 = vadd.f32 %v1063, %v1128
        %v1145 = vadd.f32 %v1064, %v1129
        %v1146 = vadd.f32 %v1065, %v1130
        %v1147 = vadd.f32 %v1131, %v1133
        %v1148 = vadd.f32 %v1147, %v1135
        %v1149 = vadd.f32 %v1148, %v1137
        %v1150 = vadd.f32 %v1149, %v1139
        %v1151 = vadd.f32 %v1150, %v1141
        %v1152 = vadd.f32 %v1151, %v1143
        %v1153 = vadd.f32 %v1152, %v1145
        %v1154 = vrot.slane %v1153, 4
        %v1155 = vadd.f32 %v1153, %v1154
        %v1156 = vrot.slane %v1155, 2
        %v1157 = vadd.f32 %v1155, %v1156
        %v1158 = vrot.slane %v1157, 1
        %v1159 = vadd.f32 %v1157, %v1158
        %vm1160 = vcmask 261120
        %v1161 = vsel %vm1160, %v1132, 0.0
        %v1162 = vsel %vm1160, %v1134, 0.0
        %v1163 = vadd.f32 %v1161, %v1162
        %v1164 = vsel %vm1160, %v1136, 0.0
        %v1165 = vadd.f32 %v1163, %v1164
        %v1166 = vsel %vm1160, %v1138, 0.0
        %v1167 = vadd.f32 %v1165, %v1166
        %v1168 = vsel %vm1160, %v1140, 0.0
        %v1169 = vadd.f32 %v1167, %v1168
        %v1170 = vsel %vm1160, %v1142, 0.0
        %v1171 = vadd.f32 %v1169, %v1170
        %v1172 = vsel %vm1160, %v1144, 0.0
        %v1173 = vadd.f32 %v1171, %v1172
        %v1174 = vsel %vm1160, %v1146, 0.0
        %v1175 = vadd.f32 %v1173, %v1174
        %v1176 = vrot.slane %v1175, 4
        %v1177 = vadd.f32 %v1175, %v1176
        %v1178 = vrot.slane %v1177, 2
        %v1179 = vadd.f32 %v1177, %v1178
        %v1180 = vrot.slane %v1179, 1
        %v1181 = vadd.f32 %v1179, %v1180
        %v1182 = vmul.f32 %v1159, 0.1
        %v1183 = vmul.f32 %v1181, 0.1
        %v1184 = vmul.f32 %v1182, %v1182
        %v1185 = vmul.f32 %v1183, %v1183
        %v1187 = vsel %vm1160, %v1185, 0
        %1189 = vmatpush.msra.mxu0 %v241
        %1190 = vmatpush.msra.mxu0 %v239
        %1191 = vmatpush.msra.mxu0 %v237
        %1192 = vmatpush.msra.mxu0 %v235
        %1193 = vmatpush.msra.mxu0 %v233
        %1194 = vmatpush.msra.mxu0 %v231
        %1195 = vmatpush.msra.mxu0 %v229
        %1196 = vmatpush.msra.mxu0 %v227
        %1197 = vmatpush.msra.mxu0 %v225
        %1198 = vmatpush.msra.mxu0 %v223
        %1199 = vmatpush.msra.mxu0 %v221
        %1200 = vmatpush.msra.mxu0 %v219
        %1201 = vmatpush.msra.mxu0 %v217
        %1202 = vmatpush.msra.mxu0 %v215
        %1203 = vmatpush.msra.mxu0 %v213
        %1204 = vmatpush.msra.mxu0 %v211
        %1205 = vmatmul.f32.gmra.mxu0 %v1184
        %v1206 = vpop.f32.mrf.mxu0
        %v1207 = vadd.f32 0.0, %v1206
        %1208 = vdwg.mxu0
        %1209 = vmatpush.msra.mxu0 0.0
        %1210 = vmatpush.msra.mxu0 0.0
        %1211 = vmatpush.msra.mxu0 0.0
        %1212 = vmatpush.msra.mxu0 0.0
        %1213 = vmatpush.msra.mxu0 0.0
        %1214 = vmatpush.msra.mxu0 0.0
        %1215 = vmatpush.msra.mxu0 0.0
        %1216 = vmatpush.msra.mxu0 0.0
        %1217 = vmatpush.msra.mxu0 0.0
        %1218 = vmatpush.msra.mxu0 0.0
        %1219 = vmatpush.msra.mxu0 0.0
        %1220 = vmatpush.msra.mxu0 0.0
        %1221 = vmatpush.msra.mxu0 %v249
        %1222 = vmatpush.msra.mxu0 %v247
        %1223 = vmatpush.msra.mxu0 %v245
        %1224 = vmatpush.msra.mxu0 %v243
        %1225 = vmatmul.f32.gmra.mxu0 %v1187
        %v1226 = vpop.f32.mrf.mxu0
        %v1227 = vadd.f32 %v1207, %v1226
        %1228 = vdwg.mxu0
        %1229 = vmatpush.msra.mxu0 %v242
        %1230 = vmatpush.msra.mxu0 %v240
        %1231 = vmatpush.msra.mxu0 %v238
        %1232 = vmatpush.msra.mxu0 %v236
        %1233 = vmatpush.msra.mxu0 %v234
        %1234 = vmatpush.msra.mxu0 %v232
        %1235 = vmatpush.msra.mxu0 %v230
        %1236 = vmatpush.msra.mxu0 %v228
        %1237 = vmatpush.msra.mxu0 %v226
        %1238 = vmatpush.msra.mxu0 %v224
        %1239 = vmatpush.msra.mxu0 %v222
        %1240 = vmatpush.msra.mxu0 %v220
        %1241 = vmatpush.msra.mxu0 %v218
        %1242 = vmatpush.msra.mxu0 %v216
        %1243 = vmatpush.msra.mxu0 %v214
        %1244 = vmatpush.msra.mxu0 %v212
        %1245 = vmatmul.f32.gmra.mxu0 %v1184
        %v1246 = vpop.f32.mrf.mxu0
        %v1247 = vadd.f32 0.0, %v1246
        %1248 = vdwg.mxu0
        %1249 = vmatpush.msra.mxu0 0.0
        %1250 = vmatpush.msra.mxu0 0.0
        %1251 = vmatpush.msra.mxu0 0.0
        %1252 = vmatpush.msra.mxu0 0.0
        %1253 = vmatpush.msra.mxu0 0.0
        %1254 = vmatpush.msra.mxu0 0.0
        %1255 = vmatpush.msra.mxu0 0.0
        %1256 = vmatpush.msra.mxu0 0.0
        %1257 = vmatpush.msra.mxu0 0.0
        %1258 = vmatpush.msra.mxu0 0.0
        %1259 = vmatpush.msra.mxu0 0.0
        %1260 = vmatpush.msra.mxu0 0.0
        %1261 = vmatpush.msra.mxu0 %v250
        %1262 = vmatpush.msra.mxu0 %v248
        %1263 = vmatpush.msra.mxu0 %v246
        %1264 = vmatpush.msra.mxu0 %v244
        %1265 = vmatmul.f32.gmra.mxu0 %v1187
        %v1266 = vpop.f32.mrf.mxu0
        %v1267 = vadd.f32 %v1247, %v1266
        %1268 = vdwg.mxu0
        %v1269 = vrsqrt.pop %v1227
        %v1270 = vmul.f32 %v1269, %v1227
        %v1271 = vmul.f32 %v1270, %v1269
        %v1272 = vmul.f32 0.5, %v1271
        %v1273 = vsub.f32 1.5, %v1272
        %v1274 = vmul.f32 %v1269, %v1273
        %vm1275 = vweird.f32 %v1227
        %vm1276 = vweird.f32 %v1269
        %vm1277 = vmor %vm1275, %vm1276
        %v1278 = vsel %vm1277, %v1269, %v1274
        %v1279 = vrsqrt.pop %v1267
        %v1280 = vmul.f32 %v1279, %v1267
        %v1281 = vmul.f32 %v1280, %v1279
        %v1282 = vmul.f32 0.5, %v1281
        %v1283 = vsub.f32 1.5, %v1282
        %v1284 = vmul.f32 %v1279, %v1283
        %vm1285 = vweird.f32 %v1267
        %vm1286 = vweird.f32 %v1279
        %vm1287 = vmor %vm1285, %vm1286
        %v1288 = vsel %vm1287, %v1279, %v1284
        %v1289 = vmul.f32 %v1227, %v1278
        %v1290 = vmul.f32 %v1267, %v1288
        %v1291 = vadd.f32 %v1227, 1.0
        %v1292 = vadd.f32 %v1267, 1.0
        %v1293 = vrcp.pop %v1291
        %v1294 = vmul.f32 %v1291, %v1293
        %v1295 = vsub.f32 1.0, %v1294
        %v1296 = vmul.f32 %v1293, %v1295
        %v1297 = vadd.f32 %v1293, %v1296
        %vm1298 = vweird.f32 %v1291
        %vm1299 = vweird.f32 %v1293
        %vm1300 = vmor %vm1298, %vm1299
        %v1301 = vsel %vm1300, %v1293, %v1297
        %v1302 = vand.u32 2147483647, %v1291
        %vm1303 = vcmp.eq.f32.partialorder %v1302, 8.507059e+37
        %v1304 = vand.u32 %v1291, 2147483648
        %v1305 = vor.u32 1.1754944e-38, %v1304
        %v1306 = vsel %vm1303, %v1305, %v1301
        %v1307 = vmul.f32 %v1289, %v1306
        %v1308 = vrcp.pop %v1292
        %v1309 = vmul.f32 %v1292, %v1308
        %v1310 = vsub.f32 1.0, %v1309
        %v1311 = vmul.f32 %v1308, %v1310
        %v1312 = vadd.f32 %v1308, %v1311
        %vm1313 = vweird.f32 %v1292
        %vm1314 = vweird.f32 %v1308
        %vm1315 = vmor %vm1313, %vm1314
        %v1316 = vsel %vm1315, %v1308, %v1312
        %v1317 = vand.u32 2147483647, %v1292
        %vm1318 = vcmp.eq.f32.partialorder %v1317, 8.507059e+37
        %v1319 = vand.u32 %v1292, 2147483648
        %v1320 = vor.u32 1.1754944e-38, %v1319
        %v1321 = vsel %vm1318, %v1320, %v1316
        %v1322 = vmul.f32 %v1290, %v1321
        %v1323 = vmul.f32 %v1182, %v1307
        %v1324 = vmul.f32 %v1183, %v1322
        %v1325 = vperm.slane %v1323, 0
        %v1326 = vperm.slane %v1324, 0
        %v1327 = vmul.f32 %v1131, %v1325
        %v1328 = vmul.f32 %v1132, %v1326
        %v1329 = vmul.f32 %v1133, %v1325
        %v1330 = vmul.f32 %v1134, %v1326
        %v1331 = vmul.f32 %v1135, %v1325
        %v1332 = vmul.f32 %v1136, %v1326
        %v1333 = vmul.f32 %v1137, %v1325
        %v1334 = vmul.f32 %v1138, %v1326
        %v1335 = vmul.f32 %v1139, %v1325
        %v1336 = vmul.f32 %v1140, %v1326
        %v1337 = vmul.f32 %v1141, %v1325
        %v1338 = vmul.f32 %v1142, %v1326
        %v1339 = vmul.f32 %v1143, %v1325
        %v1340 = vmul.f32 %v1144, %v1326
        %v1341 = vmul.f32 %v1145, %v1325
        %v1342 = vmul.f32 %v1146, %v1326
        %v1344 = vsel %vm1160, %v1328, 0
        %v1347 = vsel %vm1160, %v1330, 0
        %v1350 = vsel %vm1160, %v1332, 0
        %v1353 = vsel %vm1160, %v1334, 0
        %v1356 = vsel %vm1160, %v1336, 0
        %v1359 = vsel %vm1160, %v1338, 0
        %v1362 = vsel %vm1160, %v1340, 0
        %v1365 = vsel %vm1160, %v1342, 0
        %1367 = vmatpush.msra.mxu0 %v241
        %1368 = vmatpush.msra.mxu0 %v239
        %1369 = vmatpush.msra.mxu0 %v237
        %1370 = vmatpush.msra.mxu0 %v235
        %1371 = vmatpush.msra.mxu0 %v233
        %1372 = vmatpush.msra.mxu0 %v231
        %1373 = vmatpush.msra.mxu0 %v229
        %1374 = vmatpush.msra.mxu0 %v227
        %1375 = vmatpush.msra.mxu0 %v225
        %1376 = vmatpush.msra.mxu0 %v223
        %1377 = vmatpush.msra.mxu0 %v221
        %1378 = vmatpush.msra.mxu0 %v219
        %1379 = vmatpush.msra.mxu0 %v217
        %1380 = vmatpush.msra.mxu0 %v215
        %1381 = vmatpush.msra.mxu0 %v213
        %1382 = vmatpush.msra.mxu0 %v211
        %1383 = vmatmul.f32.gmra.mxu0 %v1327
        %v1384 = vpop.f32.mrf.mxu0
        %v1385 = vadd.f32 0.0, %v1384
        %1386 = vmatmul.f32.gmra.mxu0 %v1329
        %v1387 = vpop.f32.mrf.mxu0
        %v1388 = vadd.f32 0.0, %v1387
        %1389 = vmatmul.f32.gmra.mxu0 %v1331
        %v1390 = vpop.f32.mrf.mxu0
        %v1391 = vadd.f32 0.0, %v1390
        %1392 = vmatmul.f32.gmra.mxu0 %v1333
        %v1393 = vpop.f32.mrf.mxu0
        %v1394 = vadd.f32 0.0, %v1393
        %1395 = vmatmul.f32.gmra.mxu0 %v1335
        %v1396 = vpop.f32.mrf.mxu0
        %v1397 = vadd.f32 0.0, %v1396
        %1398 = vmatmul.f32.gmra.mxu0 %v1337
        %v1399 = vpop.f32.mrf.mxu0
        %v1400 = vadd.f32 0.0, %v1399
        %1401 = vmatmul.f32.gmra.mxu0 %v1339
        %v1402 = vpop.f32.mrf.mxu0
        %v1403 = vadd.f32 0.0, %v1402
        %1404 = vmatmul.f32.gmra.mxu0 %v1341
        %v1405 = vpop.f32.mrf.mxu0
        %v1406 = vadd.f32 0.0, %v1405
        %1407 = vdwg.mxu0
        %1408 = vmatpush.msra.mxu0 0.0
        %1409 = vmatpush.msra.mxu0 0.0
        %1410 = vmatpush.msra.mxu0 0.0
        %1411 = vmatpush.msra.mxu0 0.0
        %1412 = vmatpush.msra.mxu0 0.0
        %1413 = vmatpush.msra.mxu0 0.0
        %1414 = vmatpush.msra.mxu0 0.0
        %1415 = vmatpush.msra.mxu0 0.0
        %1416 = vmatpush.msra.mxu0 0.0
        %1417 = vmatpush.msra.mxu0 0.0
        %1418 = vmatpush.msra.mxu0 0.0
        %1419 = vmatpush.msra.mxu0 0.0
        %1420 = vmatpush.msra.mxu0 %v249
        %1421 = vmatpush.msra.mxu0 %v247
        %1422 = vmatpush.msra.mxu0 %v245
        %1423 = vmatpush.msra.mxu0 %v243
        %1424 = vmatmul.f32.gmra.mxu0 %v1344
        %v1425 = vpop.f32.mrf.mxu0
        %v1426 = vadd.f32 %v1385, %v1425
        %1427 = vmatmul.f32.gmra.mxu0 %v1347
        %v1428 = vpop.f32.mrf.mxu0
        %v1429 = vadd.f32 %v1388, %v1428
        %1430 = vmatmul.f32.gmra.mxu0 %v1350
        %v1431 = vpop.f32.mrf.mxu0
        %v1432 = vadd.f32 %v1391, %v1431
        %1433 = vmatmul.f32.gmra.mxu0 %v1353
        %v1434 = vpop.f32.mrf.mxu0
        %v1435 = vadd.f32 %v1394, %v1434
        %1436 = vmatmul.f32.gmra.mxu0 %v1356
        %v1437 = vpop.f32.mrf.mxu0
        %v1438 = vadd.f32 %v1397, %v1437
        %1439 = vmatmul.f32.gmra.mxu0 %v1359
        %v1440 = vpop.f32.mrf.mxu0
        %v1441 = vadd.f32 %v1400, %v1440
        %1442 = vmatmul.f32.gmra.mxu0 %v1362
        %v1443 = vpop.f32.mrf.mxu0
        %v1444 = vadd.f32 %v1403, %v1443
        %1445 = vmatmul.f32.gmra.mxu0 %v1365
        %v1446 = vpop.f32.mrf.mxu0
        %v1447 = vadd.f32 %v1406, %v1446
        %1448 = vdwg.mxu0
        %1449 = vmatpush.msra.mxu0 %v242
        %1450 = vmatpush.msra.mxu0 %v240
        %1451 = vmatpush.msra.mxu0 %v238
        %1452 = vmatpush.msra.mxu0 %v236
        %1453 = vmatpush.msra.mxu0 %v234
        %1454 = vmatpush.msra.mxu0 %v232
        %1455 = vmatpush.msra.mxu0 %v230
        %1456 = vmatpush.msra.mxu0 %v228
        %1457 = vmatpush.msra.mxu0 %v226
        %1458 = vmatpush.msra.mxu0 %v224
        %1459 = vmatpush.msra.mxu0 %v222
        %1460 = vmatpush.msra.mxu0 %v220
        %1461 = vmatpush.msra.mxu0 %v218
        %1462 = vmatpush.msra.mxu0 %v216
        %1463 = vmatpush.msra.mxu0 %v214
        %1464 = vmatpush.msra.mxu0 %v212
        %1465 = vmatmul.f32.gmra.mxu0 %v1327
        %v1466 = vpop.f32.mrf.mxu0
        %v1467 = vadd.f32 0.0, %v1466
        %1468 = vmatmul.f32.gmra.mxu0 %v1329
        %v1469 = vpop.f32.mrf.mxu0
        %v1470 = vadd.f32 0.0, %v1469
        %1471 = vmatmul.f32.gmra.mxu0 %v1331
        %v1472 = vpop.f32.mrf.mxu0
        %v1473 = vadd.f32 0.0, %v1472
        %1474 = vmatmul.f32.gmra.mxu0 %v1333
        %v1475 = vpop.f32.mrf.mxu0
        %v1476 = vadd.f32 0.0, %v1475
        %1477 = vmatmul.f32.gmra.mxu0 %v1335
        %v1478 = vpop.f32.mrf.mxu0
        %v1479 = vadd.f32 0.0, %v1478
        %1480 = vmatmul.f32.gmra.mxu0 %v1337
        %v1481 = vpop.f32.mrf.mxu0
        %v1482 = vadd.f32 0.0, %v1481
        %1483 = vmatmul.f32.gmra.mxu0 %v1339
        %v1484 = vpop.f32.mrf.mxu0
        %v1485 = vadd.f32 0.0, %v1484
        %1486 = vmatmul.f32.gmra.mxu0 %v1341
        %v1487 = vpop.f32.mrf.mxu0
        %v1488 = vadd.f32 0.0, %v1487
        %1489 = vdwg.mxu0
        %1490 = vmatpush.msra.mxu0 0.0
        %1491 = vmatpush.msra.mxu0 0.0
        %1492 = vmatpush.msra.mxu0 0.0
        %1493 = vmatpush.msra.mxu0 0.0
        %1494 = vmatpush.msra.mxu0 0.0
        %1495 = vmatpush.msra.mxu0 0.0
        %1496 = vmatpush.msra.mxu0 0.0
        %1497 = vmatpush.msra.mxu0 0.0
        %1498 = vmatpush.msra.mxu0 0.0
        %1499 = vmatpush.msra.mxu0 0.0
        %1500 = vmatpush.msra.mxu0 0.0
        %1501 = vmatpush.msra.mxu0 0.0
        %1502 = vmatpush.msra.mxu0 %v250
        %1503 = vmatpush.msra.mxu0 %v248
        %1504 = vmatpush.msra.mxu0 %v246
        %1505 = vmatpush.msra.mxu0 %v244
        %1506 = vmatmul.f32.gmra.mxu0 %v1344
        %v1507 = vpop.f32.mrf.mxu0
        %v1508 = vadd.f32 %v1467, %v1507
        %1509 = vmatmul.f32.gmra.mxu0 %v1347
        %v1510 = vpop.f32.mrf.mxu0
        %v1511 = vadd.f32 %v1470, %v1510
        %1512 = vmatmul.f32.gmra.mxu0 %v1350
        %v1513 = vpop.f32.mrf.mxu0
        %v1514 = vadd.f32 %v1473, %v1513
        %1515 = vmatmul.f32.gmra.mxu0 %v1353
        %v1516 = vpop.f32.mrf.mxu0
        %v1517 = vadd.f32 %v1476, %v1516
        %1518 = vmatmul.f32.gmra.mxu0 %v1356
        %v1519 = vpop.f32.mrf.mxu0
        %v1520 = vadd.f32 %v1479, %v1519
        %1521 = vmatmul.f32.gmra.mxu0 %v1359
        %v1522 = vpop.f32.mrf.mxu0
        %v1523 = vadd.f32 %v1482, %v1522
        %1524 = vmatmul.f32.gmra.mxu0 %v1362
        %v1525 = vpop.f32.mrf.mxu0
        %v1526 = vadd.f32 %v1485, %v1525
        %1527 = vmatmul.f32.gmra.mxu0 %v1365
        %v1528 = vpop.f32.mrf.mxu0
        %v1529 = vadd.f32 %v1488, %v1528
        %1530 = vdwg.mxu0
        %v1531 = vsel %vm1160, %v1508, -inf
        %v1532 = vmax.f32 %v1426, %v1531
        %1533 = vmax.xlane.f32.xlu0 %v1532
        %v1534 = vpop.xlane.xlu0 %1533
        %v1535 = vsel %vm1160, %v1511, -inf
        %v1536 = vmax.f32 %v1429, %v1535
        %1537 = vmax.xlane.f32.xlu0 %v1536
        %v1538 = vpop.xlane.xlu0 %1537
        %v1539 = vsel %vm1160, %v1514, -inf
        %v1540 = vmax.f32 %v1432, %v1539
        %1541 = vmax.xlane.f32.xlu0 %v1540
        %v1542 = vpop.xlane.xlu0 %1541
        %v1543 = vsel %vm1160, %v1517, -inf
        %v1544 = vmax.f32 %v1435, %v1543
        %1545 = vmax.xlane.f32.xlu0 %v1544
        %v1546 = vpop.xlane.xlu0 %1545
        %v1547 = vsel %vm1160, %v1520, -inf
        %v1548 = vmax.f32 %v1438, %v1547
        %1549 = vmax.xlane.f32.xlu0 %v1548
        %v1550 = vpop.xlane.xlu0 %1549
        %v1551 = vsel %vm1160, %v1523, -inf
        %v1552 = vmax.f32 %v1441, %v1551
        %1553 = vmax.xlane.f32.xlu0 %v1552
        %v1554 = vpop.xlane.xlu0 %1553
        %v1555 = vsel %vm1160, %v1526, -inf
        %v1556 = vmax.f32 %v1444, %v1555
        %1557 = vmax.xlane.f32.xlu0 %v1556
        %v1558 = vpop.xlane.xlu0 %1557
        %v1559 = vsel %vm1160, %v1529, -inf
        %v1560 = vmax.f32 %v1447, %v1559
        %1561 = vmax.xlane.f32.xlu0 %v1560
        %v1562 = vpop.xlane.xlu0 %1561
        %v1563 = vsub.f32 %v1426, %v1534
        %v1564 = vsub.f32 %v1508, %v1534
        %v1565 = vsub.f32 %v1429, %v1538
        %v1566 = vsub.f32 %v1511, %v1538
        %v1567 = vsub.f32 %v1432, %v1542
        %v1568 = vsub.f32 %v1514, %v1542
        %v1569 = vsub.f32 %v1435, %v1546
        %v1570 = vsub.f32 %v1517, %v1546
        %v1571 = vsub.f32 %v1438, %v1550
        %v1572 = vsub.f32 %v1520, %v1550
        %v1573 = vsub.f32 %v1441, %v1554
        %v1574 = vsub.f32 %v1523, %v1554
        %v1575 = vsub.f32 %v1444, %v1558
        %v1576 = vsub.f32 %v1526, %v1558
        %v1577 = vsub.f32 %v1447, %v1562
        %v1578 = vsub.f32 %v1529, %v1562
        %v1579 = vmul.f32 %v1563, 1.442695
        %v1580 = vpow.pop %v1579
        %v1581 = vmul.f32 %v1564, 1.442695
        %v1582 = vpow.pop %v1581
        %v1583 = vmul.f32 %v1565, 1.442695
        %v1584 = vpow.pop %v1583
        %v1585 = vmul.f32 %v1566, 1.442695
        %v1586 = vpow.pop %v1585
        %v1587 = vmul.f32 %v1567, 1.442695
        %v1588 = vpow.pop %v1587
        %v1589 = vmul.f32 %v1568, 1.442695
        %v1590 = vpow.pop %v1589
        %v1591 = vmul.f32 %v1569, 1.442695
        %v1592 = vpow.pop %v1591
        %v1593 = vmul.f32 %v1570, 1.442695
        %v1594 = vpow.pop %v1593
        %v1595 = vmul.f32 %v1571, 1.442695
        %v1596 = vpow.pop %v1595
        %v1597 = vmul.f32 %v1572, 1.442695
        %v1598 = vpow.pop %v1597
        %v1599 = vmul.f32 %v1573, 1.442695
        %v1600 = vpow.pop %v1599
        %v1601 = vmul.f32 %v1574, 1.442695
        %v1602 = vpow.pop %v1601
        %v1603 = vmul.f32 %v1575, 1.442695
        %v1604 = vpow.pop %v1603
        %v1605 = vmul.f32 %v1576, 1.442695
        %v1606 = vpow.pop %v1605
        %v1607 = vmul.f32 %v1577, 1.442695
        %v1608 = vpow.pop %v1607
        %v1609 = vmul.f32 %v1578, 1.442695
        %v1610 = vpow.pop %v1609
        %v1611 = vsel %vm1160, %v1582, 0.0
        %v1612 = vadd.f32 %v1580, %v1611
        %1613 = vadd.xlane.f32.xlu0 %v1612
        %v1614 = vpop.xlane.xlu0 %1613
        %v1615 = vsel %vm1160, %v1586, 0.0
        %v1616 = vadd.f32 %v1584, %v1615
        %1617 = vadd.xlane.f32.xlu0 %v1616
        %v1618 = vpop.xlane.xlu0 %1617
        %v1619 = vsel %vm1160, %v1590, 0.0
        %v1620 = vadd.f32 %v1588, %v1619
        %1621 = vadd.xlane.f32.xlu0 %v1620
        %v1622 = vpop.xlane.xlu0 %1621
        %v1623 = vsel %vm1160, %v1594, 0.0
        %v1624 = vadd.f32 %v1592, %v1623
        %1625 = vadd.xlane.f32.xlu0 %v1624
        %v1626 = vpop.xlane.xlu0 %1625
        %v1627 = vsel %vm1160, %v1598, 0.0
        %v1628 = vadd.f32 %v1596, %v1627
        %1629 = vadd.xlane.f32.xlu0 %v1628
        %v1630 = vpop.xlane.xlu0 %1629
        %v1631 = vsel %vm1160, %v1602, 0.0
        %v1632 = vadd.f32 %v1600, %v1631
        %1633 = vadd.xlane.f32.xlu0 %v1632
        %v1634 = vpop.xlane.xlu0 %1633
        %v1635 = vsel %vm1160, %v1606, 0.0
        %v1636 = vadd.f32 %v1604, %v1635
        %1637 = vadd.xlane.f32.xlu0 %v1636
        %v1638 = vpop.xlane.xlu0 %1637
        %v1639 = vsel %vm1160, %v1610, 0.0
        %v1640 = vadd.f32 %v1608, %v1639
        %1641 = vadd.xlane.f32.xlu0 %v1640
        %v1642 = vpop.xlane.xlu0 %1641
        %v1643 = vrcp.pop %v1614
        %v1644 = vmul.f32 %v1614, %v1643
        %v1645 = vsub.f32 1.0, %v1644
        %v1646 = vmul.f32 %v1643, %v1645
        %v1647 = vadd.f32 %v1643, %v1646
        %vm1648 = vweird.f32 %v1614
        %vm1649 = vweird.f32 %v1643
        %vm1650 = vmor %vm1648, %vm1649
        %v1651 = vsel %vm1650, %v1643, %v1647
        %v1652 = vand.u32 2147483647, %v1614
        %vm1653 = vcmp.eq.f32.partialorder %v1652, 8.507059e+37
        %v1654 = vand.u32 %v1614, 2147483648
        %v1655 = vor.u32 1.1754944e-38, %v1654
        %v1656 = vsel %vm1653, %v1655, %v1651
        %v1657 = vrcp.pop %v1618
        %v1658 = vmul.f32 %v1618, %v1657
        %v1659 = vsub.f32 1.0, %v1658
        %v1660 = vmul.f32 %v1657, %v1659
        %v1661 = vadd.f32 %v1657, %v1660
        %vm1662 = vweird.f32 %v1618
        %vm1663 = vweird.f32 %v1657
        %vm1664 = vmor %vm1662, %vm1663
        %v1665 = vsel %vm1664, %v1657, %v1661
        %v1666 = vand.u32 2147483647, %v1618
        %vm1667 = vcmp.eq.f32.partialorder %v1666, 8.507059e+37
        %v1668 = vand.u32 %v1618, 2147483648
        %v1669 = vor.u32 1.1754944e-38, %v1668
        %v1670 = vsel %vm1667, %v1669, %v1665
        %v1671 = vrcp.pop %v1622
        %v1672 = vmul.f32 %v1622, %v1671
        %v1673 = vsub.f32 1.0, %v1672
        %v1674 = vmul.f32 %v1671, %v1673
        %v1675 = vadd.f32 %v1671, %v1674
        %vm1676 = vweird.f32 %v1622
        %vm1677 = vweird.f32 %v1671
        %vm1678 = vmor %vm1676, %vm1677
        %v1679 = vsel %vm1678, %v1671, %v1675
        %v1680 = vand.u32 2147483647, %v1622
        %vm1681 = vcmp.eq.f32.partialorder %v1680, 8.507059e+37
        %v1682 = vand.u32 %v1622, 2147483648
        %v1683 = vor.u32 1.1754944e-38, %v1682
        %v1684 = vsel %vm1681, %v1683, %v1679
        %v1685 = vrcp.pop %v1626
        %v1686 = vmul.f32 %v1626, %v1685
        %v1687 = vsub.f32 1.0, %v1686
        %v1688 = vmul.f32 %v1685, %v1687
        %v1689 = vadd.f32 %v1685, %v1688
        %vm1690 = vweird.f32 %v1626
        %vm1691 = vweird.f32 %v1685
        %vm1692 = vmor %vm1690, %vm1691
        %v1693 = vsel %vm1692, %v1685, %v1689
        %v1694 = vand.u32 2147483647, %v1626
        %vm1695 = vcmp.eq.f32.partialorder %v1694, 8.507059e+37
        %v1696 = vand.u32 %v1626, 2147483648
        %v1697 = vor.u32 1.1754944e-38, %v1696
        %v1698 = vsel %vm1695, %v1697, %v1693
        %v1699 = vrcp.pop %v1630
        %v1700 = vmul.f32 %v1630, %v1699
        %v1701 = vsub.f32 1.0, %v1700
        %v1702 = vmul.f32 %v1699, %v1701
        %v1703 = vadd.f32 %v1699, %v1702
        %vm1704 = vweird.f32 %v1630
        %vm1705 = vweird.f32 %v1699
        %vm1706 = vmor %vm1704, %vm1705
        %v1707 = vsel %vm1706, %v1699, %v1703
        %v1708 = vand.u32 2147483647, %v1630
        %vm1709 = vcmp.eq.f32.partialorder %v1708, 8.507059e+37
        %v1710 = vand.u32 %v1630, 2147483648
        %v1711 = vor.u32 1.1754944e-38, %v1710
        %v1712 = vsel %vm1709, %v1711, %v1707
        %v1713 = vrcp.pop %v1634
        %v1714 = vmul.f32 %v1634, %v1713
        %v1715 = vsub.f32 1.0, %v1714
        %v1716 = vmul.f32 %v1713, %v1715
        %v1717 = vadd.f32 %v1713, %v1716
        %vm1718 = vweird.f32 %v1634
        %vm1719 = vweird.f32 %v1713
        %vm1720 = vmor %vm1718, %vm1719
        %v1721 = vsel %vm1720, %v1713, %v1717
        %v1722 = vand.u32 2147483647, %v1634
        %vm1723 = vcmp.eq.f32.partialorder %v1722, 8.507059e+37
        %v1724 = vand.u32 %v1634, 2147483648
        %v1725 = vor.u32 1.1754944e-38, %v1724
        %v1726 = vsel %vm1723, %v1725, %v1721
        %v1727 = vrcp.pop %v1638
        %v1728 = vmul.f32 %v1638, %v1727
        %v1729 = vsub.f32 1.0, %v1728
        %v1730 = vmul.f32 %v1727, %v1729
        %v1731 = vadd.f32 %v1727, %v1730
        %vm1732 = vweird.f32 %v1638
        %vm1733 = vweird.f32 %v1727
        %vm1734 = vmor %vm1732, %vm1733
        %v1735 = vsel %vm1734, %v1727, %v1731
        %v1736 = vand.u32 2147483647, %v1638
        %vm1737 = vcmp.eq.f32.partialorder %v1736, 8.507059e+37
        %v1738 = vand.u32 %v1638, 2147483648
        %v1739 = vor.u32 1.1754944e-38, %v1738
        %v1740 = vsel %vm1737, %v1739, %v1735
        %v1741 = vrcp.pop %v1642
        %v1742 = vmul.f32 %v1642, %v1741
        %v1743 = vsub.f32 1.0, %v1742
        %v1744 = vmul.f32 %v1741, %v1743
        %v1745 = vadd.f32 %v1741, %v1744
        %vm1746 = vweird.f32 %v1642
        %vm1747 = vweird.f32 %v1741
        %vm1748 = vmor %vm1746, %vm1747
        %v1749 = vsel %vm1748, %v1741, %v1745
        %v1750 = vand.u32 2147483647, %v1642
        %vm1751 = vcmp.eq.f32.partialorder %v1750, 8.507059e+37
        %v1752 = vand.u32 %v1642, 2147483648
        %v1753 = vor.u32 1.1754944e-38, %v1752
        %v1754 = vsel %vm1751, %v1753, %v1749
        %v1755 = vmul.f32 %v1656, 16.0
        %v1756 = vmul.f32 %v1670, 16.0
        %v1757 = vmul.f32 %v1684, 16.0
        %v1758 = vmul.f32 %v1698, 16.0
        %v1759 = vmul.f32 %v1712, 16.0
        %v1760 = vmul.f32 %v1726, 16.0
        %v1761 = vmul.f32 %v1740, 16.0
        %v1762 = vmul.f32 %v1754, 16.0
        %v1763 = vmul.f32 %v1580, %v1755
        %v1764 = vmul.f32 %v1582, %v1755
        %v1765 = vmul.f32 %v1584, %v1756
        %v1766 = vmul.f32 %v1586, %v1756
        %v1767 = vmul.f32 %v1588, %v1757
        %v1768 = vmul.f32 %v1590, %v1757
        %v1769 = vmul.f32 %v1592, %v1758
        %v1770 = vmul.f32 %v1594, %v1758
        %v1771 = vmul.f32 %v1596, %v1759
        %v1772 = vmul.f32 %v1598, %v1759
        %v1773 = vmul.f32 %v1600, %v1760
        %v1774 = vmul.f32 %v1602, %v1760
        %v1775 = vmul.f32 %v1604, %v1761
        %v1776 = vmul.f32 %v1606, %v1761
        %v1777 = vmul.f32 %v1608, %v1762
        %v1778 = vmul.f32 %v1610, %v1762
        %v1779 = vmul.f32 %v1763, %v1131
        %v1780 = vmul.f32 %v1764, %v1132
        %v1781 = vmul.f32 %v1765, %v1133
        %v1782 = vmul.f32 %v1766, %v1134
        %v1783 = vmul.f32 %v1767, %v1135
        %v1784 = vmul.f32 %v1768, %v1136
        %v1785 = vmul.f32 %v1769, %v1137
        %v1786 = vmul.f32 %v1770, %v1138
        %v1787 = vmul.f32 %v1771, %v1139
        %v1788 = vmul.f32 %v1772, %v1140
        %v1789 = vmul.f32 %v1773, %v1141
        %v1790 = vmul.f32 %v1774, %v1142
        %v1791 = vmul.f32 %v1775, %v1143
        %v1792 = vmul.f32 %v1776, %v1144
        %v1793 = vmul.f32 %v1777, %v1145
        %v1794 = vmul.f32 %v1778, %v1146
        %v1795 = vadd.f32 %v1779, %v1781
        %v1796 = vadd.f32 %v1795, %v1783
        %v1797 = vadd.f32 %v1796, %v1785
        %v1798 = vadd.f32 %v1797, %v1787
        %v1799 = vadd.f32 %v1798, %v1789
        %v1800 = vadd.f32 %v1799, %v1791
        %v1801 = vadd.f32 %v1800, %v1793
        %v1802 = vrot.slane %v1801, 4
        %v1803 = vadd.f32 %v1801, %v1802
        %v1804 = vrot.slane %v1803, 2
        %v1805 = vadd.f32 %v1803, %v1804
        %v1806 = vrot.slane %v1805, 1
        %v1807 = vadd.f32 %v1805, %v1806
        %v1808 = vsel %vm1160, %v1780, 0.0
        %v1809 = vsel %vm1160, %v1782, 0.0
        %v1810 = vadd.f32 %v1808, %v1809
        %v1811 = vsel %vm1160, %v1784, 0.0
        %v1812 = vadd.f32 %v1810, %v1811
        %v1813 = vsel %vm1160, %v1786, 0.0
        %v1814 = vadd.f32 %v1812, %v1813
        %v1815 = vsel %vm1160, %v1788, 0.0
        %v1816 = vadd.f32 %v1814, %v1815
        %v1817 = vsel %vm1160, %v1790, 0.0
        %v1818 = vadd.f32 %v1816, %v1817
        %v1819 = vsel %vm1160, %v1792, 0.0
        %v1820 = vadd.f32 %v1818, %v1819
        %v1821 = vsel %vm1160, %v1794, 0.0
        %v1822 = vadd.f32 %v1820, %v1821
        %v1823 = vrot.slane %v1822, 4
        %v1824 = vadd.f32 %v1822, %v1823
        %v1825 = vrot.slane %v1824, 2
        %v1826 = vadd.f32 %v1824, %v1825
        %v1827 = vrot.slane %v1826, 1
        %v1828 = vadd.f32 %v1826, %v1827
        %v1829 = vmul.f32 %v1807, %v1807
        %v1830 = vmul.f32 %v1828, %v1828
        %v1832 = vsel %vm1160, %v1830, 0
        %1834 = vmatpush.msra.mxu0 %v241
        %1835 = vmatpush.msra.mxu0 %v239
        %1836 = vmatpush.msra.mxu0 %v237
        %1837 = vmatpush.msra.mxu0 %v235
        %1838 = vmatpush.msra.mxu0 %v233
        %1839 = vmatpush.msra.mxu0 %v231
        %1840 = vmatpush.msra.mxu0 %v229
        %1841 = vmatpush.msra.mxu0 %v227
        %1842 = vmatpush.msra.mxu0 %v225
        %1843 = vmatpush.msra.mxu0 %v223
        %1844 = vmatpush.msra.mxu0 %v221
        %1845 = vmatpush.msra.mxu0 %v219
        %1846 = vmatpush.msra.mxu0 %v217
        %1847 = vmatpush.msra.mxu0 %v215
        %1848 = vmatpush.msra.mxu0 %v213
        %1849 = vmatpush.msra.mxu0 %v211
        %1850 = vmatmul.f32.gmra.mxu0 %v1829
        %v1851 = vpop.f32.mrf.mxu0
        %v1852 = vadd.f32 0.0, %v1851
        %1853 = vdwg.mxu0
        %1854 = vmatpush.msra.mxu0 0.0
        %1855 = vmatpush.msra.mxu0 0.0
        %1856 = vmatpush.msra.mxu0 0.0
        %1857 = vmatpush.msra.mxu0 0.0
        %1858 = vmatpush.msra.mxu0 0.0
        %1859 = vmatpush.msra.mxu0 0.0
        %1860 = vmatpush.msra.mxu0 0.0
        %1861 = vmatpush.msra.mxu0 0.0
        %1862 = vmatpush.msra.mxu0 0.0
        %1863 = vmatpush.msra.mxu0 0.0
        %1864 = vmatpush.msra.mxu0 0.0
        %1865 = vmatpush.msra.mxu0 0.0
        %1866 = vmatpush.msra.mxu0 %v249
        %1867 = vmatpush.msra.mxu0 %v247
        %1868 = vmatpush.msra.mxu0 %v245
        %1869 = vmatpush.msra.mxu0 %v243
        %1870 = vmatmul.f32.gmra.mxu0 %v1832
        %v1871 = vpop.f32.mrf.mxu0
        %v1872 = vadd.f32 %v1852, %v1871
        %1873 = vdwg.mxu0
        %1874 = vmatpush.msra.mxu0 %v242
        %1875 = vmatpush.msra.mxu0 %v240
        %1876 = vmatpush.msra.mxu0 %v238
        %1877 = vmatpush.msra.mxu0 %v236
        %1878 = vmatpush.msra.mxu0 %v234
        %1879 = vmatpush.msra.mxu0 %v232
        %1880 = vmatpush.msra.mxu0 %v230
        %1881 = vmatpush.msra.mxu0 %v228
        %1882 = vmatpush.msra.mxu0 %v226
        %1883 = vmatpush.msra.mxu0 %v224
        %1884 = vmatpush.msra.mxu0 %v222
        %1885 = vmatpush.msra.mxu0 %v220
        %1886 = vmatpush.msra.mxu0 %v218
        %1887 = vmatpush.msra.mxu0 %v216
        %1888 = vmatpush.msra.mxu0 %v214
        %1889 = vmatpush.msra.mxu0 %v212
        %1890 = vmatmul.f32.gmra.mxu0 %v1829
        %v1891 = vpop.f32.mrf.mxu0
        %v1892 = vadd.f32 0.0, %v1891
        %1893 = vdwg.mxu0
        %1894 = vmatpush.msra.mxu0 0.0
        %1895 = vmatpush.msra.mxu0 0.0
        %1896 = vmatpush.msra.mxu0 0.0
        %1897 = vmatpush.msra.mxu0 0.0
        %1898 = vmatpush.msra.mxu0 0.0
        %1899 = vmatpush.msra.mxu0 0.0
        %1900 = vmatpush.msra.mxu0 0.0
        %1901 = vmatpush.msra.mxu0 0.0
        %1902 = vmatpush.msra.mxu0 0.0
        %1903 = vmatpush.msra.mxu0 0.0
        %1904 = vmatpush.msra.mxu0 0.0
        %1905 = vmatpush.msra.mxu0 0.0
        %1906 = vmatpush.msra.mxu0 %v250
        %1907 = vmatpush.msra.mxu0 %v248
        %1908 = vmatpush.msra.mxu0 %v246
        %1909 = vmatpush.msra.mxu0 %v244
        %1910 = vmatmul.f32.gmra.mxu0 %v1832
        %v1911 = vpop.f32.mrf.mxu0
        %v1912 = vadd.f32 %v1892, %v1911
        %1913 = vdwg.mxu0
        %v1914 = vrsqrt.pop %v1872
        %v1915 = vmul.f32 %v1914, %v1872
        %v1916 = vmul.f32 %v1915, %v1914
        %v1917 = vmul.f32 0.5, %v1916
        %v1918 = vsub.f32 1.5, %v1917
        %v1919 = vmul.f32 %v1914, %v1918
        %vm1920 = vweird.f32 %v1872
        %vm1921 = vweird.f32 %v1914
        %vm1922 = vmor %vm1920, %vm1921
        %v1923 = vsel %vm1922, %v1914, %v1919
        %v1924 = vrsqrt.pop %v1912
        %v1925 = vmul.f32 %v1924, %v1912
        %v1926 = vmul.f32 %v1925, %v1924
        %v1927 = vmul.f32 0.5, %v1926
        %v1928 = vsub.f32 1.5, %v1927
        %v1929 = vmul.f32 %v1924, %v1928
        %vm1930 = vweird.f32 %v1912
        %vm1931 = vweird.f32 %v1924
        %vm1932 = vmor %vm1930, %vm1931
        %v1933 = vsel %vm1932, %v1924, %v1929
        %v1934 = vmul.f32 %v1872, %v1923
        %v1935 = vmul.f32 %v1912, %v1933
        %v1936 = vadd.f32 %v1872, 1.0
        %v1937 = vadd.f32 %v1912, 1.0
        %v1938 = vrcp.pop %v1936
        %v1939 = vmul.f32 %v1936, %v1938
        %v1940 = vsub.f32 1.0, %v1939
        %v1941 = vmul.f32 %v1938, %v1940
        %v1942 = vadd.f32 %v1938, %v1941
        %vm1943 = vweird.f32 %v1936
        %vm1944 = vweird.f32 %v1938
        %vm1945 = vmor %vm1943, %vm1944
        %v1946 = vsel %vm1945, %v1938, %v1942
        %v1947 = vand.u32 2147483647, %v1936
        %vm1948 = vcmp.eq.f32.partialorder %v1947, 8.507059e+37
        %v1949 = vand.u32 %v1936, 2147483648
        %v1950 = vor.u32 1.1754944e-38, %v1949
        %v1951 = vsel %vm1948, %v1950, %v1946
        %v1952 = vmul.f32 %v1934, %v1951
        %v1953 = vrcp.pop %v1937
        %v1954 = vmul.f32 %v1937, %v1953
        %v1955 = vsub.f32 1.0, %v1954
        %v1956 = vmul.f32 %v1953, %v1955
        %v1957 = vadd.f32 %v1953, %v1956
        %vm1958 = vweird.f32 %v1937
        %vm1959 = vweird.f32 %v1953
        %vm1960 = vmor %vm1958, %vm1959
        %v1961 = vsel %vm1960, %v1953, %v1957
        %v1962 = vand.u32 2147483647, %v1937
        %vm1963 = vcmp.eq.f32.partialorder %v1962, 8.507059e+37
        %v1964 = vand.u32 %v1937, 2147483648
        %v1965 = vor.u32 1.1754944e-38, %v1964
        %v1966 = vsel %vm1963, %v1965, %v1961
        %v1967 = vmul.f32 %v1935, %v1966
        %v1968 = vmul.f32 %v1807, %v1952
        %v1969 = vmul.f32 %v1828, %v1967
        %v1970 = vperm.slane %v1968, 0
        %v1971 = vperm.slane %v1969, 0
        %v1972 = vmul.f32 %v1131, %v1970
        %v1973 = vmul.f32 %v1132, %v1971
        %v1974 = vmul.f32 %v1133, %v1970
        %v1975 = vmul.f32 %v1134, %v1971
        %v1976 = vmul.f32 %v1135, %v1970
        %v1977 = vmul.f32 %v1136, %v1971
        %v1978 = vmul.f32 %v1137, %v1970
        %v1979 = vmul.f32 %v1138, %v1971
        %v1980 = vmul.f32 %v1139, %v1970
        %v1981 = vmul.f32 %v1140, %v1971
        %v1982 = vmul.f32 %v1141, %v1970
        %v1983 = vmul.f32 %v1142, %v1971
        %v1984 = vmul.f32 %v1143, %v1970
        %v1985 = vmul.f32 %v1144, %v1971
        %v1986 = vmul.f32 %v1145, %v1970
        %v1987 = vmul.f32 %v1146, %v1971
        %v1989 = vsel %vm1160, %v1973, 0
        %v1992 = vsel %vm1160, %v1975, 0
        %v1995 = vsel %vm1160, %v1977, 0
        %v1998 = vsel %vm1160, %v1979, 0
        %v2001 = vsel %vm1160, %v1981, 0
        %v2004 = vsel %vm1160, %v1983, 0
        %v2007 = vsel %vm1160, %v1985, 0
        %v2010 = vsel %vm1160, %v1987, 0
        %2012 = vmatpush.msra.mxu0 %v241
        %2013 = vmatpush.msra.mxu0 %v239
        %2014 = vmatpush.msra.mxu0 %v237
        %2015 = vmatpush.msra.mxu0 %v235
        %2016 = vmatpush.msra.mxu0 %v233
        %2017 = vmatpush.msra.mxu0 %v231
        %2018 = vmatpush.msra.mxu0 %v229
        %2019 = vmatpush.msra.mxu0 %v227
        %2020 = vmatpush.msra.mxu0 %v225
        %2021 = vmatpush.msra.mxu0 %v223
        %2022 = vmatpush.msra.mxu0 %v221
        %2023 = vmatpush.msra.mxu0 %v219
        %2024 = vmatpush.msra.mxu0 %v217
        %2025 = vmatpush.msra.mxu0 %v215
        %2026 = vmatpush.msra.mxu0 %v213
        %2027 = vmatpush.msra.mxu0 %v211
        %2028 = vmatmul.f32.gmra.mxu0 %v1972
        %v2029 = vpop.f32.mrf.mxu0
        %v2030 = vadd.f32 0.0, %v2029
        %2031 = vmatmul.f32.gmra.mxu0 %v1974
        %v2032 = vpop.f32.mrf.mxu0
        %v2033 = vadd.f32 0.0, %v2032
        %2034 = vmatmul.f32.gmra.mxu0 %v1976
        %v2035 = vpop.f32.mrf.mxu0
        %v2036 = vadd.f32 0.0, %v2035
        %2037 = vmatmul.f32.gmra.mxu0 %v1978
        %v2038 = vpop.f32.mrf.mxu0
        %v2039 = vadd.f32 0.0, %v2038
        %2040 = vmatmul.f32.gmra.mxu0 %v1980
        %v2041 = vpop.f32.mrf.mxu0
        %v2042 = vadd.f32 0.0, %v2041
        %2043 = vmatmul.f32.gmra.mxu0 %v1982
        %v2044 = vpop.f32.mrf.mxu0
        %v2045 = vadd.f32 0.0, %v2044
        %2046 = vmatmul.f32.gmra.mxu0 %v1984
        %v2047 = vpop.f32.mrf.mxu0
        %v2048 = vadd.f32 0.0, %v2047
        %2049 = vmatmul.f32.gmra.mxu0 %v1986
        %v2050 = vpop.f32.mrf.mxu0
        %v2051 = vadd.f32 0.0, %v2050
        %2052 = vdwg.mxu0
        %2053 = vmatpush.msra.mxu0 0.0
        %2054 = vmatpush.msra.mxu0 0.0
        %2055 = vmatpush.msra.mxu0 0.0
        %2056 = vmatpush.msra.mxu0 0.0
        %2057 = vmatpush.msra.mxu0 0.0
        %2058 = vmatpush.msra.mxu0 0.0
        %2059 = vmatpush.msra.mxu0 0.0
        %2060 = vmatpush.msra.mxu0 0.0
        %2061 = vmatpush.msra.mxu0 0.0
        %2062 = vmatpush.msra.mxu0 0.0
        %2063 = vmatpush.msra.mxu0 0.0
        %2064 = vmatpush.msra.mxu0 0.0
        %2065 = vmatpush.msra.mxu0 %v249
        %2066 = vmatpush.msra.mxu0 %v247
        %2067 = vmatpush.msra.mxu0 %v245
        %2068 = vmatpush.msra.mxu0 %v243
        %2069 = vmatmul.f32.gmra.mxu0 %v1989
        %v2070 = vpop.f32.mrf.mxu0
        %v2071 = vadd.f32 %v2030, %v2070
        %2072 = vmatmul.f32.gmra.mxu0 %v1992
        %v2073 = vpop.f32.mrf.mxu0
        %v2074 = vadd.f32 %v2033, %v2073
        %2075 = vmatmul.f32.gmra.mxu0 %v1995
        %v2076 = vpop.f32.mrf.mxu0
        %v2077 = vadd.f32 %v2036, %v2076
        %2078 = vmatmul.f32.gmra.mxu0 %v1998
        %v2079 = vpop.f32.mrf.mxu0
        %v2080 = vadd.f32 %v2039, %v2079
        %2081 = vmatmul.f32.gmra.mxu0 %v2001
        %v2082 = vpop.f32.mrf.mxu0
        %v2083 = vadd.f32 %v2042, %v2082
        %2084 = vmatmul.f32.gmra.mxu0 %v2004
        %v2085 = vpop.f32.mrf.mxu0
        %v2086 = vadd.f32 %v2045, %v2085
        %2087 = vmatmul.f32.gmra.mxu0 %v2007
        %v2088 = vpop.f32.mrf.mxu0
        %v2089 = vadd.f32 %v2048, %v2088
        %2090 = vmatmul.f32.gmra.mxu0 %v2010
        %v2091 = vpop.f32.mrf.mxu0
        %v2092 = vadd.f32 %v2051, %v2091
        %2093 = vdwg.mxu0
        %2094 = vmatpush.msra.mxu0 %v242
        %2095 = vmatpush.msra.mxu0 %v240
        %2096 = vmatpush.msra.mxu0 %v238
        %2097 = vmatpush.msra.mxu0 %v236
        %2098 = vmatpush.msra.mxu0 %v234
        %2099 = vmatpush.msra.mxu0 %v232
        %2100 = vmatpush.msra.mxu0 %v230
        %2101 = vmatpush.msra.mxu0 %v228
        %2102 = vmatpush.msra.mxu0 %v226
        %2103 = vmatpush.msra.mxu0 %v224
        %2104 = vmatpush.msra.mxu0 %v222
        %2105 = vmatpush.msra.mxu0 %v220
        %2106 = vmatpush.msra.mxu0 %v218
        %2107 = vmatpush.msra.mxu0 %v216
        %2108 = vmatpush.msra.mxu0 %v214
        %2109 = vmatpush.msra.mxu0 %v212
        %2110 = vmatmul.f32.gmra.mxu0 %v1972
        %v2111 = vpop.f32.mrf.mxu0
        %v2112 = vadd.f32 0.0, %v2111
        %2113 = vmatmul.f32.gmra.mxu0 %v1974
        %v2114 = vpop.f32.mrf.mxu0
        %v2115 = vadd.f32 0.0, %v2114
        %2116 = vmatmul.f32.gmra.mxu0 %v1976
        %v2117 = vpop.f32.mrf.mxu0
        %v2118 = vadd.f32 0.0, %v2117
        %2119 = vmatmul.f32.gmra.mxu0 %v1978
        %v2120 = vpop.f32.mrf.mxu0
        %v2121 = vadd.f32 0.0, %v2120
        %2122 = vmatmul.f32.gmra.mxu0 %v1980
        %v2123 = vpop.f32.mrf.mxu0
        %v2124 = vadd.f32 0.0, %v2123
        %2125 = vmatmul.f32.gmra.mxu0 %v1982
        %v2126 = vpop.f32.mrf.mxu0
        %v2127 = vadd.f32 0.0, %v2126
        %2128 = vmatmul.f32.gmra.mxu0 %v1984
        %v2129 = vpop.f32.mrf.mxu0
        %v2130 = vadd.f32 0.0, %v2129
        %2131 = vmatmul.f32.gmra.mxu0 %v1986
        %v2132 = vpop.f32.mrf.mxu0
        %v2133 = vadd.f32 0.0, %v2132
        %2134 = vdwg.mxu0
        %2135 = vmatpush.msra.mxu0 0.0
        %2136 = vmatpush.msra.mxu0 0.0
        %2137 = vmatpush.msra.mxu0 0.0
        %2138 = vmatpush.msra.mxu0 0.0
        %2139 = vmatpush.msra.mxu0 0.0
        %2140 = vmatpush.msra.mxu0 0.0
        %2141 = vmatpush.msra.mxu0 0.0
        %2142 = vmatpush.msra.mxu0 0.0
        %2143 = vmatpush.msra.mxu0 0.0
        %2144 = vmatpush.msra.mxu0 0.0
        %2145 = vmatpush.msra.mxu0 0.0
        %2146 = vmatpush.msra.mxu0 0.0
        %2147 = vmatpush.msra.mxu0 %v250
        %2148 = vmatpush.msra.mxu0 %v248
        %2149 = vmatpush.msra.mxu0 %v246
        %2150 = vmatpush.msra.mxu0 %v244
        %2151 = vmatmul.f32.gmra.mxu0 %v1989
        %v2152 = vpop.f32.mrf.mxu0
        %v2153 = vadd.f32 %v2112, %v2152
        %2154 = vmatmul.f32.gmra.mxu0 %v1992
        %v2155 = vpop.f32.mrf.mxu0
        %v2156 = vadd.f32 %v2115, %v2155
        %2157 = vmatmul.f32.gmra.mxu0 %v1995
        %v2158 = vpop.f32.mrf.mxu0
        %v2159 = vadd.f32 %v2118, %v2158
        %2160 = vmatmul.f32.gmra.mxu0 %v1998
        %v2161 = vpop.f32.mrf.mxu0
        %v2162 = vadd.f32 %v2121, %v2161
        %2163 = vmatmul.f32.gmra.mxu0 %v2001
        %v2164 = vpop.f32.mrf.mxu0
        %v2165 = vadd.f32 %v2124, %v2164
        %2166 = vmatmul.f32.gmra.mxu0 %v2004
        %v2167 = vpop.f32.mrf.mxu0
        %v2168 = vadd.f32 %v2127, %v2167
        %2169 = vmatmul.f32.gmra.mxu0 %v2007
        %v2170 = vpop.f32.mrf.mxu0
        %v2171 = vadd.f32 %v2130, %v2170
        %2172 = vmatmul.f32.gmra.mxu0 %v2010
        %v2173 = vpop.f32.mrf.mxu0
        %v2174 = vadd.f32 %v2133, %v2173
        %2175 = vdwg.mxu0
        %v2176 = vadd.f32 %v1426, %v2071
        %v2177 = vadd.f32 %v1508, %v2153
        %v2178 = vadd.f32 %v1429, %v2074
        %v2179 = vadd.f32 %v1511, %v2156
        %v2180 = vadd.f32 %v1432, %v2077
        %v2181 = vadd.f32 %v1514, %v2159
        %v2182 = vadd.f32 %v1435, %v2080
        %v2183 = vadd.f32 %v1517, %v2162
        %v2184 = vadd.f32 %v1438, %v2083
        %v2185 = vadd.f32 %v1520, %v2165
        %v2186 = vadd.f32 %v1441, %v2086
        %v2187 = vadd.f32 %v1523, %v2168
        %v2188 = vadd.f32 %v1444, %v2089
        %v2189 = vadd.f32 %v1526, %v2171
        %v2190 = vadd.f32 %v1447, %v2092
        %v2191 = vadd.f32 %v1529, %v2174
        %v2192 = vsel %vm1160, %v2177, -inf
        %v2193 = vmax.f32 %v2176, %v2192
        %2194 = vmax.xlane.f32.xlu0 %v2193
        %v2195 = vpop.xlane.xlu0 %2194
        %v2196 = vsel %vm1160, %v2179, -inf
        %v2197 = vmax.f32 %v2178, %v2196
        %2198 = vmax.xlane.f32.xlu0 %v2197
        %v2199 = vpop.xlane.xlu0 %2198
        %v2200 = vsel %vm1160, %v2181, -inf
        %v2201 = vmax.f32 %v2180, %v2200
        %2202 = vmax.xlane.f32.xlu0 %v2201
        %v2203 = vpop.xlane.xlu0 %2202
        %v2204 = vsel %vm1160, %v2183, -inf
        %v2205 = vmax.f32 %v2182, %v2204
        %2206 = vmax.xlane.f32.xlu0 %v2205
        %v2207 = vpop.xlane.xlu0 %2206
        %v2208 = vsel %vm1160, %v2185, -inf
        %v2209 = vmax.f32 %v2184, %v2208
        %2210 = vmax.xlane.f32.xlu0 %v2209
        %v2211 = vpop.xlane.xlu0 %2210
        %v2212 = vsel %vm1160, %v2187, -inf
        %v2213 = vmax.f32 %v2186, %v2212
        %2214 = vmax.xlane.f32.xlu0 %v2213
        %v2215 = vpop.xlane.xlu0 %2214
        %v2216 = vsel %vm1160, %v2189, -inf
        %v2217 = vmax.f32 %v2188, %v2216
        %2218 = vmax.xlane.f32.xlu0 %v2217
        %v2219 = vpop.xlane.xlu0 %2218
        %v2220 = vsel %vm1160, %v2191, -inf
        %v2221 = vmax.f32 %v2190, %v2220
        %2222 = vmax.xlane.f32.xlu0 %v2221
        %v2223 = vpop.xlane.xlu0 %2222
        %v2224 = vsub.f32 %v2176, %v2195
        %v2225 = vsub.f32 %v2177, %v2195
        %v2226 = vsub.f32 %v2178, %v2199
        %v2227 = vsub.f32 %v2179, %v2199
        %v2228 = vsub.f32 %v2180, %v2203
        %v2229 = vsub.f32 %v2181, %v2203
        %v2230 = vsub.f32 %v2182, %v2207
        %v2231 = vsub.f32 %v2183, %v2207
        %v2232 = vsub.f32 %v2184, %v2211
        %v2233 = vsub.f32 %v2185, %v2211
        %v2234 = vsub.f32 %v2186, %v2215
        %v2235 = vsub.f32 %v2187, %v2215
        %v2236 = vsub.f32 %v2188, %v2219
        %v2237 = vsub.f32 %v2189, %v2219
        %v2238 = vsub.f32 %v2190, %v2223
        %v2239 = vsub.f32 %v2191, %v2223
        %v2240 = vmul.f32 %v2224, 1.442695
        %v2241 = vpow.pop %v2240
        %v2242 = vmul.f32 %v2225, 1.442695
        %v2243 = vpow.pop %v2242
        %v2244 = vmul.f32 %v2226, 1.442695
        %v2245 = vpow.pop %v2244
        %v2246 = vmul.f32 %v2227, 1.442695
        %v2247 = vpow.pop %v2246
        %v2248 = vmul.f32 %v2228, 1.442695
        %v2249 = vpow.pop %v2248
        %v2250 = vmul.f32 %v2229, 1.442695
        %v2251 = vpow.pop %v2250
        %v2252 = vmul.f32 %v2230, 1.442695
        %v2253 = vpow.pop %v2252
        %v2254 = vmul.f32 %v2231, 1.442695
        %v2255 = vpow.pop %v2254
        %v2256 = vmul.f32 %v2232, 1.442695
        %v2257 = vpow.pop %v2256
        %v2258 = vmul.f32 %v2233, 1.442695
        %v2259 = vpow.pop %v2258
        %v2260 = vmul.f32 %v2234, 1.442695
        %v2261 = vpow.pop %v2260
        %v2262 = vmul.f32 %v2235, 1.442695
        %v2263 = vpow.pop %v2262
        %v2264 = vmul.f32 %v2236, 1.442695
        %v2265 = vpow.pop %v2264
        %v2266 = vmul.f32 %v2237, 1.442695
        %v2267 = vpow.pop %v2266
        %v2268 = vmul.f32 %v2238, 1.442695
        %v2269 = vpow.pop %v2268
        %v2270 = vmul.f32 %v2239, 1.442695
        %v2271 = vpow.pop %v2270
        %v2272 = vsel %vm1160, %v2243, 0.0
        %v2273 = vadd.f32 %v2241, %v2272
        %2274 = vadd.xlane.f32.xlu0 %v2273
        %v2275 = vpop.xlane.xlu0 %2274
        %v2276 = vsel %vm1160, %v2247, 0.0
        %v2277 = vadd.f32 %v2245, %v2276
        %2278 = vadd.xlane.f32.xlu0 %v2277
        %v2279 = vpop.xlane.xlu0 %2278
        %v2280 = vsel %vm1160, %v2251, 0.0
        %v2281 = vadd.f32 %v2249, %v2280
        %2282 = vadd.xlane.f32.xlu0 %v2281
        %v2283 = vpop.xlane.xlu0 %2282
        %v2284 = vsel %vm1160, %v2255, 0.0
        %v2285 = vadd.f32 %v2253, %v2284
        %2286 = vadd.xlane.f32.xlu0 %v2285
        %v2287 = vpop.xlane.xlu0 %2286
        %v2288 = vsel %vm1160, %v2259, 0.0
        %v2289 = vadd.f32 %v2257, %v2288
        %2290 = vadd.xlane.f32.xlu0 %v2289
        %v2291 = vpop.xlane.xlu0 %2290
        %v2292 = vsel %vm1160, %v2263, 0.0
        %v2293 = vadd.f32 %v2261, %v2292
        %2294 = vadd.xlane.f32.xlu0 %v2293
        %v2295 = vpop.xlane.xlu0 %2294
        %v2296 = vsel %vm1160, %v2267, 0.0
        %v2297 = vadd.f32 %v2265, %v2296
        %2298 = vadd.xlane.f32.xlu0 %v2297
        %v2299 = vpop.xlane.xlu0 %2298
        %v2300 = vsel %vm1160, %v2271, 0.0
        %v2301 = vadd.f32 %v2269, %v2300
        %2302 = vadd.xlane.f32.xlu0 %v2301
        %v2303 = vpop.xlane.xlu0 %2302
        %v2304 = vrcp.pop %v2275
        %v2305 = vmul.f32 %v2275, %v2304
        %v2306 = vsub.f32 1.0, %v2305
        %v2307 = vmul.f32 %v2304, %v2306
        %v2308 = vadd.f32 %v2304, %v2307
        %vm2309 = vweird.f32 %v2275
        %vm2310 = vweird.f32 %v2304
        %vm2311 = vmor %vm2309, %vm2310
        %v2312 = vsel %vm2311, %v2304, %v2308
        %v2313 = vand.u32 2147483647, %v2275
        %vm2314 = vcmp.eq.f32.partialorder %v2313, 8.507059e+37
        %v2315 = vand.u32 %v2275, 2147483648
        %v2316 = vor.u32 1.1754944e-38, %v2315
        %v2317 = vsel %vm2314, %v2316, %v2312
        %v2318 = vrcp.pop %v2279
        %v2319 = vmul.f32 %v2279, %v2318
        %v2320 = vsub.f32 1.0, %v2319
        %v2321 = vmul.f32 %v2318, %v2320
        %v2322 = vadd.f32 %v2318, %v2321
        %vm2323 = vweird.f32 %v2279
        %vm2324 = vweird.f32 %v2318
        %vm2325 = vmor %vm2323, %vm2324
        %v2326 = vsel %vm2325, %v2318, %v2322
        %v2327 = vand.u32 2147483647, %v2279
        %vm2328 = vcmp.eq.f32.partialorder %v2327, 8.507059e+37
        %v2329 = vand.u32 %v2279, 2147483648
        %v2330 = vor.u32 1.1754944e-38, %v2329
        %v2331 = vsel %vm2328, %v2330, %v2326
        %v2332 = vrcp.pop %v2283
        %v2333 = vmul.f32 %v2283, %v2332
        %v2334 = vsub.f32 1.0, %v2333
        %v2335 = vmul.f32 %v2332, %v2334
        %v2336 = vadd.f32 %v2332, %v2335
        %vm2337 = vweird.f32 %v2283
        %vm2338 = vweird.f32 %v2332
        %vm2339 = vmor %vm2337, %vm2338
        %v2340 = vsel %vm2339, %v2332, %v2336
        %v2341 = vand.u32 2147483647, %v2283
        %vm2342 = vcmp.eq.f32.partialorder %v2341, 8.507059e+37
        %v2343 = vand.u32 %v2283, 2147483648
        %v2344 = vor.u32 1.1754944e-38, %v2343
        %v2345 = vsel %vm2342, %v2344, %v2340
        %v2346 = vrcp.pop %v2287
        %v2347 = vmul.f32 %v2287, %v2346
        %v2348 = vsub.f32 1.0, %v2347
        %v2349 = vmul.f32 %v2346, %v2348
        %v2350 = vadd.f32 %v2346, %v2349
        %vm2351 = vweird.f32 %v2287
        %vm2352 = vweird.f32 %v2346
        %vm2353 = vmor %vm2351, %vm2352
        %v2354 = vsel %vm2353, %v2346, %v2350
        %v2355 = vand.u32 2147483647, %v2287
        %vm2356 = vcmp.eq.f32.partialorder %v2355, 8.507059e+37
        %v2357 = vand.u32 %v2287, 2147483648
        %v2358 = vor.u32 1.1754944e-38, %v2357
        %v2359 = vsel %vm2356, %v2358, %v2354
        %v2360 = vrcp.pop %v2291
        %v2361 = vmul.f32 %v2291, %v2360
        %v2362 = vsub.f32 1.0, %v2361
        %v2363 = vmul.f32 %v2360, %v2362
        %v2364 = vadd.f32 %v2360, %v2363
        %vm2365 = vweird.f32 %v2291
        %vm2366 = vweird.f32 %v2360
        %vm2367 = vmor %vm2365, %vm2366
        %v2368 = vsel %vm2367, %v2360, %v2364
        %v2369 = vand.u32 2147483647, %v2291
        %vm2370 = vcmp.eq.f32.partialorder %v2369, 8.507059e+37
        %v2371 = vand.u32 %v2291, 2147483648
        %v2372 = vor.u32 1.1754944e-38, %v2371
        %v2373 = vsel %vm2370, %v2372, %v2368
        %v2374 = vrcp.pop %v2295
        %v2375 = vmul.f32 %v2295, %v2374
        %v2376 = vsub.f32 1.0, %v2375
        %v2377 = vmul.f32 %v2374, %v2376
        %v2378 = vadd.f32 %v2374, %v2377
        %vm2379 = vweird.f32 %v2295
        %vm2380 = vweird.f32 %v2374
        %vm2381 = vmor %vm2379, %vm2380
        %v2382 = vsel %vm2381, %v2374, %v2378
        %v2383 = vand.u32 2147483647, %v2295
        %vm2384 = vcmp.eq.f32.partialorder %v2383, 8.507059e+37
        %v2385 = vand.u32 %v2295, 2147483648
        %v2386 = vor.u32 1.1754944e-38, %v2385
        %v2387 = vsel %vm2384, %v2386, %v2382
        %v2388 = vrcp.pop %v2299
        %v2389 = vmul.f32 %v2299, %v2388
        %v2390 = vsub.f32 1.0, %v2389
        %v2391 = vmul.f32 %v2388, %v2390
        %v2392 = vadd.f32 %v2388, %v2391
        %vm2393 = vweird.f32 %v2299
        %vm2394 = vweird.f32 %v2388
        %vm2395 = vmor %vm2393, %vm2394
        %v2396 = vsel %vm2395, %v2388, %v2392
        %v2397 = vand.u32 2147483647, %v2299
        %vm2398 = vcmp.eq.f32.partialorder %v2397, 8.507059e+37
        %v2399 = vand.u32 %v2299, 2147483648
        %v2400 = vor.u32 1.1754944e-38, %v2399
        %v2401 = vsel %vm2398, %v2400, %v2396
        %v2402 = vrcp.pop %v2303
        %v2403 = vmul.f32 %v2303, %v2402
        %v2404 = vsub.f32 1.0, %v2403
        %v2405 = vmul.f32 %v2402, %v2404
        %v2406 = vadd.f32 %v2402, %v2405
        %vm2407 = vweird.f32 %v2303
        %vm2408 = vweird.f32 %v2402
        %vm2409 = vmor %vm2407, %vm2408
        %v2410 = vsel %vm2409, %v2402, %v2406
        %v2411 = vand.u32 2147483647, %v2303
        %vm2412 = vcmp.eq.f32.partialorder %v2411, 8.507059e+37
        %v2413 = vand.u32 %v2303, 2147483648
        %v2414 = vor.u32 1.1754944e-38, %v2413
        %v2415 = vsel %vm2412, %v2414, %v2410
        %v2416 = vmul.f32 %v2317, 16.0
        %v2417 = vmul.f32 %v2331, 16.0
        %v2418 = vmul.f32 %v2345, 16.0
        %v2419 = vmul.f32 %v2359, 16.0
        %v2420 = vmul.f32 %v2373, 16.0
        %v2421 = vmul.f32 %v2387, 16.0
        %v2422 = vmul.f32 %v2401, 16.0
        %v2423 = vmul.f32 %v2415, 16.0
        %v2424 = vmul.f32 %v2241, %v2416
        %v2425 = vmul.f32 %v2243, %v2416
        %v2426 = vmul.f32 %v2245, %v2417
        %v2427 = vmul.f32 %v2247, %v2417
        %v2428 = vmul.f32 %v2249, %v2418
        %v2429 = vmul.f32 %v2251, %v2418
        %v2430 = vmul.f32 %v2253, %v2419
        %v2431 = vmul.f32 %v2255, %v2419
        %v2432 = vmul.f32 %v2257, %v2420
        %v2433 = vmul.f32 %v2259, %v2420
        %v2434 = vmul.f32 %v2261, %v2421
        %v2435 = vmul.f32 %v2263, %v2421
        %v2436 = vmul.f32 %v2265, %v2422
        %v2437 = vmul.f32 %v2267, %v2422
        %v2438 = vmul.f32 %v2269, %v2423
        %v2439 = vmul.f32 %v2271, %v2423
        %v2440 = vmul.f32 %v2424, %v1131
        %v2441 = vmul.f32 %v2425, %v1132
        %v2442 = vmul.f32 %v2426, %v1133
        %v2443 = vmul.f32 %v2427, %v1134
        %v2444 = vmul.f32 %v2428, %v1135
        %v2445 = vmul.f32 %v2429, %v1136
        %v2446 = vmul.f32 %v2430, %v1137
        %v2447 = vmul.f32 %v2431, %v1138
        %v2448 = vmul.f32 %v2432, %v1139
        %v2449 = vmul.f32 %v2433, %v1140
        %v2450 = vmul.f32 %v2434, %v1141
        %v2451 = vmul.f32 %v2435, %v1142
        %v2452 = vmul.f32 %v2436, %v1143
        %v2453 = vmul.f32 %v2437, %v1144
        %v2454 = vmul.f32 %v2438, %v1145
        %v2455 = vmul.f32 %v2439, %v1146
        %v2456 = vadd.f32 %v2440, %v2442
        %v2457 = vadd.f32 %v2456, %v2444
        %v2458 = vadd.f32 %v2457, %v2446
        %v2459 = vadd.f32 %v2458, %v2448
        %v2460 = vadd.f32 %v2459, %v2450
        %v2461 = vadd.f32 %v2460, %v2452
        %v2462 = vadd.f32 %v2461, %v2454
        %v2463 = vrot.slane %v2462, 4
        %v2464 = vadd.f32 %v2462, %v2463
        %v2465 = vrot.slane %v2464, 2
        %v2466 = vadd.f32 %v2464, %v2465
        %v2467 = vrot.slane %v2466, 1
        %v2468 = vadd.f32 %v2466, %v2467
        %v2469 = vsel %vm1160, %v2441, 0.0
        %v2470 = vsel %vm1160, %v2443, 0.0
        %v2471 = vadd.f32 %v2469, %v2470
        %v2472 = vsel %vm1160, %v2445, 0.0
        %v2473 = vadd.f32 %v2471, %v2472
        %v2474 = vsel %vm1160, %v2447, 0.0
        %v2475 = vadd.f32 %v2473, %v2474
        %v2476 = vsel %vm1160, %v2449, 0.0
        %v2477 = vadd.f32 %v2475, %v2476
        %v2478 = vsel %vm1160, %v2451, 0.0
        %v2479 = vadd.f32 %v2477, %v2478
        %v2480 = vsel %vm1160, %v2453, 0.0
        %v2481 = vadd.f32 %v2479, %v2480
        %v2482 = vsel %vm1160, %v2455, 0.0
        %v2483 = vadd.f32 %v2481, %v2482
        %v2484 = vrot.slane %v2483, 4
        %v2485 = vadd.f32 %v2483, %v2484
        %v2486 = vrot.slane %v2485, 2
        %v2487 = vadd.f32 %v2485, %v2486
        %v2488 = vrot.slane %v2487, 1
        %v2489 = vadd.f32 %v2487, %v2488
        %v2490 = vmul.f32 %v2468, %v2468
        %v2491 = vmul.f32 %v2489, %v2489
        %v2493 = vsel %vm1160, %v2491, 0
        %2495 = vmatpush.msra.mxu0 %v241
        %2496 = vmatpush.msra.mxu0 %v239
        %2497 = vmatpush.msra.mxu0 %v237
        %2498 = vmatpush.msra.mxu0 %v235
        %2499 = vmatpush.msra.mxu0 %v233
        %2500 = vmatpush.msra.mxu0 %v231
        %2501 = vmatpush.msra.mxu0 %v229
        %2502 = vmatpush.msra.mxu0 %v227
        %2503 = vmatpush.msra.mxu0 %v225
        %2504 = vmatpush.msra.mxu0 %v223
        %2505 = vmatpush.msra.mxu0 %v221
        %2506 = vmatpush.msra.mxu0 %v219
        %2507 = vmatpush.msra.mxu0 %v217
        %2508 = vmatpush.msra.mxu0 %v215
        %2509 = vmatpush.msra.mxu0 %v213
        %2510 = vmatpush.msra.mxu0 %v211
        %2511 = vmatmul.f32.gmra.mxu0 %v2490
        %v2512 = vpop.f32.mrf.mxu0
        %v2513 = vadd.f32 0.0, %v2512
        %2514 = vdwg.mxu0
        %2515 = vmatpush.msra.mxu0 0.0
        %2516 = vmatpush.msra.mxu0 0.0
        %2517 = vmatpush.msra.mxu0 0.0
        %2518 = vmatpush.msra.mxu0 0.0
        %2519 = vmatpush.msra.mxu0 0.0
        %2520 = vmatpush.msra.mxu0 0.0
        %2521 = vmatpush.msra.mxu0 0.0
        %2522 = vmatpush.msra.mxu0 0.0
        %2523 = vmatpush.msra.mxu0 0.0
        %2524 = vmatpush.msra.mxu0 0.0
        %2525 = vmatpush.msra.mxu0 0.0
        %2526 = vmatpush.msra.mxu0 0.0
        %2527 = vmatpush.msra.mxu0 %v249
        %2528 = vmatpush.msra.mxu0 %v247
        %2529 = vmatpush.msra.mxu0 %v245
        %2530 = vmatpush.msra.mxu0 %v243
        %2531 = vmatmul.f32.gmra.mxu0 %v2493
        %v2532 = vpop.f32.mrf.mxu0
        %v2533 = vadd.f32 %v2513, %v2532
        %2534 = vdwg.mxu0
        %2535 = vmatpush.msra.mxu0 %v242
        %2536 = vmatpush.msra.mxu0 %v240
        %2537 = vmatpush.msra.mxu0 %v238
        %2538 = vmatpush.msra.mxu0 %v236
        %2539 = vmatpush.msra.mxu0 %v234
        %2540 = vmatpush.msra.mxu0 %v232
        %2541 = vmatpush.msra.mxu0 %v230
        %2542 = vmatpush.msra.mxu0 %v228
        %2543 = vmatpush.msra.mxu0 %v226
        %2544 = vmatpush.msra.mxu0 %v224
        %2545 = vmatpush.msra.mxu0 %v222
        %2546 = vmatpush.msra.mxu0 %v220
        %2547 = vmatpush.msra.mxu0 %v218
        %2548 = vmatpush.msra.mxu0 %v216
        %2549 = vmatpush.msra.mxu0 %v214
        %2550 = vmatpush.msra.mxu0 %v212
        %2551 = vmatmul.f32.gmra.mxu0 %v2490
        %v2552 = vpop.f32.mrf.mxu0
        %v2553 = vadd.f32 0.0, %v2552
        %2554 = vdwg.mxu0
        %2555 = vmatpush.msra.mxu0 0.0
        %2556 = vmatpush.msra.mxu0 0.0
        %2557 = vmatpush.msra.mxu0 0.0
        %2558 = vmatpush.msra.mxu0 0.0
        %2559 = vmatpush.msra.mxu0 0.0
        %2560 = vmatpush.msra.mxu0 0.0
        %2561 = vmatpush.msra.mxu0 0.0
        %2562 = vmatpush.msra.mxu0 0.0
        %2563 = vmatpush.msra.mxu0 0.0
        %2564 = vmatpush.msra.mxu0 0.0
        %2565 = vmatpush.msra.mxu0 0.0
        %2566 = vmatpush.msra.mxu0 0.0
        %2567 = vmatpush.msra.mxu0 %v250
        %2568 = vmatpush.msra.mxu0 %v248
        %2569 = vmatpush.msra.mxu0 %v246
        %2570 = vmatpush.msra.mxu0 %v244
        %2571 = vmatmul.f32.gmra.mxu0 %v2493
        %v2572 = vpop.f32.mrf.mxu0
        %v2573 = vadd.f32 %v2553, %v2572
        %2574 = vdwg.mxu0
        %v2575 = vrsqrt.pop %v2533
        %v2576 = vmul.f32 %v2575, %v2533
        %v2577 = vmul.f32 %v2576, %v2575
        %v2578 = vmul.f32 0.5, %v2577
        %v2579 = vsub.f32 1.5, %v2578
        %v2580 = vmul.f32 %v2575, %v2579
        %vm2581 = vweird.f32 %v2533
        %vm2582 = vweird.f32 %v2575
        %vm2583 = vmor %vm2581, %vm2582
        %v2584 = vsel %vm2583, %v2575, %v2580
        %v2585 = vrsqrt.pop %v2573
        %v2586 = vmul.f32 %v2585, %v2573
        %v2587 = vmul.f32 %v2586, %v2585
        %v2588 = vmul.f32 0.5, %v2587
        %v2589 = vsub.f32 1.5, %v2588
        %v2590 = vmul.f32 %v2585, %v2589
        %vm2591 = vweird.f32 %v2573
        %vm2592 = vweird.f32 %v2585
        %vm2593 = vmor %vm2591, %vm2592
        %v2594 = vsel %vm2593, %v2585, %v2590
        %v2595 = vmul.f32 %v2533, %v2584
        %v2596 = vmul.f32 %v2573, %v2594
        %v2597 = vadd.f32 %v2533, 1.0
        %v2598 = vadd.f32 %v2573, 1.0
        %v2599 = vrcp.pop %v2597
        %v2600 = vmul.f32 %v2597, %v2599
        %v2601 = vsub.f32 1.0, %v2600
        %v2602 = vmul.f32 %v2599, %v2601
        %v2603 = vadd.f32 %v2599, %v2602
        %vm2604 = vweird.f32 %v2597
        %vm2605 = vweird.f32 %v2599
        %vm2606 = vmor %vm2604, %vm2605
        %v2607 = vsel %vm2606, %v2599, %v2603
        %v2608 = vand.u32 2147483647, %v2597
        %vm2609 = vcmp.eq.f32.partialorder %v2608, 8.507059e+37
        %v2610 = vand.u32 %v2597, 2147483648
        %v2611 = vor.u32 1.1754944e-38, %v2610
        %v2612 = vsel %vm2609, %v2611, %v2607
        %v2613 = vmul.f32 %v2595, %v2612
        %v2614 = vrcp.pop %v2598
        %v2615 = vmul.f32 %v2598, %v2614
        %v2616 = vsub.f32 1.0, %v2615
        %v2617 = vmul.f32 %v2614, %v2616
        %v2618 = vadd.f32 %v2614, %v2617
        %vm2619 = vweird.f32 %v2598
        %vm2620 = vweird.f32 %v2614
        %vm2621 = vmor %vm2619, %vm2620
        %v2622 = vsel %vm2621, %v2614, %v2618
        %v2623 = vand.u32 2147483647, %v2598
        %vm2624 = vcmp.eq.f32.partialorder %v2623, 8.507059e+37
        %v2625 = vand.u32 %v2598, 2147483648
        %v2626 = vor.u32 1.1754944e-38, %v2625
        %v2627 = vsel %vm2624, %v2626, %v2622
        %v2628 = vmul.f32 %v2596, %v2627
        %v2629 = vmul.f32 %v2468, %v2613
        %v2630 = vmul.f32 %v2489, %v2628
        %v2633 = vrot.slane %v2630, 7
        %vm2634 = vcmask 1040384
        %v2635 = vsel %vm2634, %v2629, %v2633
        %v2637 = vlaneseq
        %vm2638 = vcmp.ge.s32.totalorder %v2637, 0
        %vm2639 = vcmp.lt.s32.totalorder %v2637, 160
        %vm2640 = vmand %vm2638, %vm2639
        %2641 = vst.msk [vmem:[%s197] sm:$0x3] %vm2640, %v2635
        %s2642 = sand.u32 %s95, 1
        %s2643 = scalar_lea.sflag [#allocation4], %s2642
        %s2644 = sand.u32 %s95, 1
        %s2645 = smul.addr %s2644, 2
        %s2646 = scalar_lea.vmem [#allocation7], %s2645
        // Predicated region
        $region41: #{tpu_custom_call.1} parent=31 // pred_check
          %p2647 = pneg %p105
        $region42: #{tpu_custom_call.1} parent=31 // pred_check_branch
          %2649 = sbr.rel (%p2647) target = $region44
        $region43: #{tpu_custom_call.1} parent=31 // pred_region
          %2651 = vsyncadd %s2643, 0
          %s2652 = smul.addr %s19, 2
          %s2653 = scalar_lea.hbm %s3, %s2652
          %s2655 = sshll.u32 %s2646, 4
          %s2656 = int_to_ptr.vmem [resolvable:$true] %s2655
          %s2657 = sshll.u32 %s2653, 4
          %s2658 = int_to_ptr.hbm [resolvable:$true] %s2657
          %2660 = dma.vmem_to_hbm [thread:$0]  %s2656, 32, %s2658, %s2643
        $region44: #{tpu_custom_call.1} parent=31 // pred_fallthru
          _
      $region32: #{tpu_custom_call.1} parent=5 // pred_fallthru
        _
      %p2661 = scmp.le.s32.totalorder 2, %s14
      // Predicated region
      $region45: #{tpu_custom_call.1} parent=5 // pred_check
        %p2662 = pneg %p2661
      $region46: #{tpu_custom_call.1} parent=5 // pred_check_branch
        %2664 = sbr.rel (%p2662) target = $region48
      $region47: #{tpu_custom_call.1} parent=5 // pred_region
        %s2665 = ssub.s32 %s14, 2
        // Predicated region
        $region49: #{tpu_custom_call.1} parent=47 // pred_check
          %p2666 = pneg %p111
        $region50: #{tpu_custom_call.1} parent=47 // pred_check_branch
          %2668 = sbr.rel (%p2666) target = $region52
        $region51: #{tpu_custom_call.1} parent=47 // pred_region
          %s2669 = sand.u32 %s96, 1
          %s2670 = scalar_lea.sflag [#allocation4], %s2669
          %s2671 = sand.u32 %s96, 1
          %s2672 = smul.addr %s2671, 2
          %s2673 = scalar_lea.vmem [#allocation7], %s2672
          %2675 = dma.done %s2670, 32
        $region52: #{tpu_custom_call.1} parent=47 // pred_fallthru
          _
      $region48: #{tpu_custom_call.1} parent=5 // pred_fallthru
        _
    $region6: #{tpu_custom_call.1} parent=1 // loop_footer
      %s18 = sadd.s32 1, %s14
    $region7: #{tpu_custom_call.1} parent=1 // loop_footer_branch
      %13 = sbr.rel target = $region3
    $region8: #{tpu_custom_call.1} parent=1 // loop_exit
      _
    %2676 = vsyncpa [#allocation3], 1
    %s2677 = scalar_lea.sflag [#allocation3], 1
    %2678 = vsyncpa %s2677, 1
    %2679 = vsyncpa [#allocation6], 1
    %2680 = vsyncpa [#allocation4], 1
    %s2681 = scalar_lea.sflag [#allocation4], 1
    %2682 = vsyncpa %s2681, 1

</llo_original>
